<compile_context>
chip_gen: v7x
topology: tpu7x:2x2x1
jax: 0.10.0
libtpu: 0.0.40
codegen_flags: <defaults>
</compile_context>

<pallas_src>
import jax
import jax.numpy as jnp
from jax.experimental import pallas as pl
from jax.experimental.pallas import tpu as pltpu


# ----------------------------- fused kernel ----------------------------------

def _make_fused_kernel(S, B, D, H, O, L):
    """Build the fused (LSTM stack + head) kernel for static problem sizes."""

    def kernel(*refs):
        # ------------------------- unpack refs ---------------------------
        idx = 0
        x_ref = refs[idx]; idx += 1                       # (S*B, D) time-major
        layers = []
        for _ in range(L):                                # per layer:
            layers.append((refs[idx],                     # w_ih^T  (D_in, 4H)
                           refs[idx + 1],                 # w_hh^T  (H, 4H)
                           refs[idx + 2]))                # bias    (1, 4H)
            idx += 3
        ws_ref, bs_ref, wf_ref, bf_ref = refs[idx:idx + 4]; idx += 4
        out_ref, hn_ref, cn_ref = refs[idx:idx + 3]; idx += 3
        gx_ref = refs[idx]; idx += 1                      # (S*B, 4H) scratch
        seq_ref = refs[idx]                               # (S*B, H)  scratch

        cur = x_ref[...]                                  # current layer input
        h_last = None

        for l in range(L):
            wih_ref, whh_ref, b_ref = layers[l]
            last_layer = (l == L - 1)

            # (1) Hoisted input projection: ONE lane-dense (4H-wide) matmul
            #     over ALL time steps, bias folded in — removed from the
            #     serial h-chain.
            gx_ref[...] = (
                jnp.dot(cur, wih_ref[...], preferred_element_type=jnp.float32)
                + b_ref[...])

            # (2) Recurrent weights loaded once per layer (loop-invariant),
            #     packed (H, 4H) so the per-step matmul fills 128 lanes.
            w_hh = whh_ref[...]

            # (3) Serial time recurrence; h/c stay in vregs as loop carries.
            def step(t, carry, w_hh=w_hh, last_layer=last_layer):
                h, c = carry
                row = pl.ds(t * B, B)
                gates = gx_ref[row, :] + jnp.dot(
                    h, w_hh, preferred_element_type=jnp.float32)   # (B, 4H)
                # PyTorch gate order: i, f, g, o (static lane slices).
                i_g = jax.nn.sigmoid(gates[:, 0 * H:1 * H])
                f_g = jax.nn.sigmoid(gates[:, 1 * H:2 * H])
                g_g = jnp.tanh(gates[:, 2 * H:3 * H])
                o_g = jax.nn.sigmoid(gates[:, 3 * H:4 * H])
                c_new = f_g * c + i_g * g_g
                h_new = o_g * jnp.tanh(c_new)
                if not last_layer:
                    # inter-layer sequence stays in VMEM, never touches HBM
                    seq_ref[row, :] = h_new
                return (h_new, c_new)

            h0 = jnp.zeros((B, H), jnp.float32)
            c0 = jnp.zeros((B, H), jnp.float32)
            h_fin, c_fin = jax.lax.fori_loop(0, S, step, (h0, c0), unroll=True)

            # (4) hn/cn written once per layer (not every time step).
            hn_ref[l] = h_fin
            cn_ref[l] = c_fin

            if not last_layer:
                cur = seq_ref[...]
            h_last = h_fin

        # ---- head: dropout(eval)=identity -> smoothing x2 -> fc ----------
        # TODO(synk): training-mode stochastic dropout would need pltpu.prng_*.
        # NOTE: forward() reassigns self.leaky_relu but never applies it.
        y = h_last
        y = jnp.dot(y, ws_ref[...], preferred_element_type=jnp.float32) + bs_ref[...]
        y = jnp.dot(y, ws_ref[...], preferred_element_type=jnp.float32) + bs_ref[...]
        out_ref[...] = (
            jnp.dot(y, wf_ref[...], preferred_element_type=jnp.float32)
            + bf_ref[...]).astype(out_ref.dtype)

    return kernel


# ----------------------------- model forward ---------------------------------

def _prep_lstm_layer(lp):
    """PyTorch (4H, D) weights -> gate-packed transposed layouts.

    Gate order (i, f, g, o) is preserved along the lane axis, so a plain
    transpose gives the packed (D_in, 4H) / (H, 4H) layouts directly.
    """
    wih = jnp.transpose(lp["w_ih"])                      # (D_in, 4H)
    whh = jnp.transpose(lp["w_hh"])                      # (H,    4H)
    b = (lp["b_ih"] + lp["b_hh"])[None, :]               # (1,    4H)
    return wih, whh, b


@jax.jit
def lstm_model_forward(x, params):
    """x: (B, S, input_dim) batch_first, like the PyTorch module.

    Returns (out (B, output_dim), hn (L, B, H), cn (L, B, H)).
    """
    B, S, D = x.shape
    L = len(params["lstm"])
    H = params["smooth_w"].shape[0]
    O = params["fc_w"].shape[0]

    # Time-major and flattened to (S*B, D): the kernel needs no reshapes.
    x_flat = jnp.transpose(x, (1, 0, 2)).astype(jnp.float32).reshape(S * B, D)

    args = [x_flat]
    for lp in params["lstm"]:
        args.extend(_prep_lstm_layer(lp))
    args += [
        jnp.transpose(params["smooth_w"]),        # (H, H)
        params["smooth_b"][None, :],              # (1, H)
        jnp.transpose(params["fc_w"]),            # (H, O)
        params["fc_b"][None, :],                  # (1, O)
    ]

    out_shapes = (
        jax.ShapeDtypeStruct((B, O), jnp.float32),
        jax.ShapeDtypeStruct((L, B, H), jnp.float32),
        jax.ShapeDtypeStruct((L, B, H), jnp.float32),
    )
    scratch = [
        pltpu.VMEM((S * B, 4 * H), jnp.float32),   # packed per-gate input proj
        pltpu.VMEM((S * B, H), jnp.float32),       # inter-layer sequence
    ]

    out, hn, cn = pl.pallas_call(
        _make_fused_kernel(S, B, D, H, O, L),
        out_shape=out_shapes,
        scratch_shapes=scratch,
    )(*args)
    return out, hn, cn


# ----------------------------- pure-JAX reference ----------------------------

def lstm_model_reference(x, params):
    B, S, _ = x.shape
    H = params["smooth_w"].shape[0]
    xs = jnp.transpose(x, (1, 0, 2)).astype(jnp.float32)          # (S, B, D)
    hns, cns = [], []
    cur = xs
    for lp in params["lstm"]:
        wih_t, whh_t = lp["w_ih"].T, lp["w_hh"].T
        bias = lp["b_ih"] + lp["b_hh"]

        def step(carry, x_t, wih_t=wih_t, whh_t=whh_t, bias=bias):
            h, c = carry
            gates = x_t @ wih_t + h @ whh_t + bias
            i = jax.nn.sigmoid(gates[:, 0 * H:1 * H])
            f = jax.nn.sigmoid(gates[:, 1 * H:2 * H])
            g = jnp.tanh(gates[:, 2 * H:3 * H])
            o = jax.nn.sigmoid(gates[:, 3 * H:4 * H])
            c = f * c + i * g
            h = o * jnp.tanh(c)
            return (h, c), h

        init = (jnp.zeros((B, H), jnp.float32), jnp.zeros((B, H), jnp.float32))
        (h_f, c_f), outs = jax.lax.scan(step, init, cur)
        hns.append(h_f); cns.append(c_f)
        cur = outs
    y = cur[-1]
    y = y @ params["smooth_w"].T + params["smooth_b"]
    y = y @ params["smooth_w"].T + params["smooth_b"]
    out = y @ params["fc_w"].T + params["fc_b"]
    return out, jnp.stack(hns), jnp.stack(cns)


# ----------------------------- parameter init --------------------------------

def init_params(key, input_dim, hidden_dim, layer_dim, output_dim):
    """Deterministic init mirroring PyTorch shapes (uniform(-1/sqrt(fan), +))."""
    params = {"lstm": []}
    k_lstm = 1.0 / jnp.sqrt(hidden_dim).astype(jnp.float32)
    keys = jax.random.split(key, 4 * layer_dim + 4)
    ki = 0
    for layer in range(layer_dim):
        d_in = input_dim if layer == 0 else hidden_dim
        w_ih = jax.random.uniform(keys[ki], (4 * hidden_dim, d_in),
                                  minval=-k_lstm, maxval=k_lstm); ki += 1
        w_hh = jax.random.uniform(keys[ki], (4 * hidden_dim, hidden_dim),
                                  minval=-k_lstm, maxval=k_lstm); ki += 1
        b_ih = jax.random.uniform(keys[ki], (4 * hidden_dim,),
                                  minval=-k_lstm, maxval=k_lstm); ki += 1
        b_hh = jax.random.uniform(keys[ki], (4 * hidden_dim,),
                                  minval=-k_lstm, maxval=k_lstm); ki += 1
        params["lstm"].append(
            {"w_ih": w_ih, "w_hh": w_hh, "b_ih": b_ih, "b_hh": b_hh})

    k_lin = 1.0 / jnp.sqrt(hidden_dim).astype(jnp.float32)
    params["smooth_w"] = jax.random.uniform(
        keys[ki], (hidden_dim, hidden_dim), minval=-k_lin, maxval=k_lin); ki += 1
    params["smooth_b"] = jax.random.uniform(
        keys[ki], (hidden_dim,), minval=-k_lin, maxval=k_lin); ki += 1
    params["fc_w"] = jax.random.uniform(
        keys[ki], (output_dim, hidden_dim), minval=-k_lin, maxval=k_lin); ki += 1
    params["fc_b"] = jax.random.uniform(
        keys[ki], (output_dim,), minval=-k_lin, maxval=k_lin); ki += 1
    return jax.tree_util.tree_map(lambda a: a.astype(jnp.float32), params)


# ----------------------------------- main -------------------------------------

if __name__ == "__main__":
    batch, seq, input_dim = 2, 8, 4
    hidden_dim, layer_dim, output_dim = 32, 2, 4

    key = jax.random.PRNGKey(0)
    k_x, k_p = jax.random.split(key)
    x = jax.random.normal(k_x, (batch, seq, input_dim), dtype=jnp.float32)
    params = init_params(k_p, input_dim, hidden_dim, layer_dim, output_dim)

    out, hn, cn = lstm_model_forward(x, params)
    jax.block_until_ready((out, hn, cn))

    assert out.shape == (batch, output_dim)
    assert hn.shape == (layer_dim, batch, hidden_dim)
    assert cn.shape == (layer_dim, batch, hidden_dim)

    out_r, hn_r, cn_r = lstm_model_reference(x, params)
    assert jnp.allclose(out, out_r, atol=1e-4, rtol=1e-4)
    assert jnp.allclose(hn, hn_r, atol=1e-4, rtol=1e-4)
    assert jnp.allclose(cn, cn_r, atol=1e-4, rtol=1e-4)

    print("KERNEL_OK")
</pallas_src>

<mosaic_0001>
module attributes {stable_mosaic.version = 11 : i64} {
  func.func @kernel(%arg0: memref<16x4xf32, #tpu.memory_space<vmem>>, %arg1: memref<4x128xf32, #tpu.memory_space<vmem>>, %arg2: memref<32x128xf32, #tpu.memory_space<vmem>>, %arg3: memref<1x128xf32, #tpu.memory_space<vmem>>, %arg4: memref<32x128xf32, #tpu.memory_space<vmem>>, %arg5: memref<32x128xf32, #tpu.memory_space<vmem>>, %arg6: memref<1x128xf32, #tpu.memory_space<vmem>>, %arg7: memref<32x32xf32, #tpu.memory_space<vmem>>, %arg8: memref<1x32xf32, #tpu.memory_space<vmem>>, %arg9: memref<32x4xf32, #tpu.memory_space<vmem>>, %arg10: memref<1x4xf32, #tpu.memory_space<vmem>>, %arg11: memref<2x4xf32, #tpu.memory_space<vmem>>, %arg12: memref<2x2x32xf32, #tpu.memory_space<vmem>>, %arg13: memref<2x2x32xf32, #tpu.memory_space<vmem>>, %arg14: memref<16x128xf32, #tpu.memory_space<vmem>>, %arg15: memref<16x32xf32, #tpu.memory_space<vmem>>) attributes {dimension_semantics = [], scalar_prefetch = 0 : i64, scratch_operands = 2 : i64, tpu.core_type = #tpu.core_type<tc>} {
    %c0 = arith.constant 0 : index
    %c0_0 = arith.constant 0 : index
    %0 = vector.load %arg0[%c0, %c0_0] : memref<16x4xf32, #tpu.memory_space<vmem>>, vector<16x4xf32>
    %c0_1 = arith.constant 0 : index
    %c0_2 = arith.constant 0 : index
    %1 = vector.load %arg1[%c0_1, %c0_2] : memref<4x128xf32, #tpu.memory_space<vmem>>, vector<4x128xf32>
    %cst = arith.constant dense<0.000000e+00> : vector<16x128xf32>
    %2 = tpu.matmul %0, %1, %cst {dimension_numbers = #tpu.dot_dimension_numbers<[1], [0], [0], [1], [0, 0, 1, 1], [], []>} : vector<16x4xf32>, vector<4x128xf32>, vector<16x128xf32> -> vector<16x128xf32>
    %c0_3 = arith.constant 0 : index
    %c0_4 = arith.constant 0 : index
    %3 = vector.load %arg3[%c0_3, %c0_4] : memref<1x128xf32, #tpu.memory_space<vmem>>, vector<1x128xf32>
    %4 = vector.broadcast %3 : vector<1x128xf32> to vector<16x128xf32>
    %5 = arith.addf %2, %4 : vector<16x128xf32>
    %c0_5 = arith.constant 0 : index
    %c0_6 = arith.constant 0 : index
    %6 = vector.load %arg14[%c0_5, %c0_6] : memref<16x128xf32, #tpu.memory_space<vmem>>, vector<16x128xf32>
    tpu.vector_store %arg14[%c0_5, %c0_6], %5 {strides = array<i32>} : memref<16x128xf32, #tpu.memory_space<vmem>>, vector<16x128xf32>,
    %c0_7 = arith.constant 0 : index
    %c0_8 = arith.constant 0 : index
    %7 = vector.load %arg2[%c0_7, %c0_8] : memref<32x128xf32, #tpu.memory_space<vmem>>, vector<32x128xf32>
    %cst_9 = arith.constant 0.000000e+00 : f32
    %8 = vector.broadcast %cst_9 : f32 to vector<2x32xf32>
    %cst_10 = arith.constant 0.000000e+00 : f32
    %9 = vector.broadcast %cst_10 : f32 to vector<2x32xf32>
    %c0_i32 = arith.constant 0 : i32
    %c2_i32 = arith.constant 2 : i32
    %10 = arith.muli %c0_i32, %c2_i32 : i32
    %11 = arith.index_cast %10 : i32 to index
    %c0_11 = arith.constant 0 : index
    %12 = vector.load %arg14[%11, %c0_11] : memref<16x128xf32, #tpu.memory_space<vmem>>, vector<2x128xf32>
    %cst_12 = arith.constant dense<0.000000e+00> : vector<2x128xf32>
    %13 = tpu.matmul %8, %7, %cst_12 {dimension_numbers = #tpu.dot_dimension_numbers<[1], [0], [0], [1], [0, 0, 1, 1], [], []>} : vector<2x32xf32>, vector<32x128xf32>, vector<2x128xf32> -> vector<2x128xf32>
    %14 = arith.addf %12, %13 : vector<2x128xf32>
    %15 = vector.extract_strided_slice %14 {offsets = [0, 0], sizes = [2, 32], strides = [1, 1]} : vector<2x128xf32> to vector<2x32xf32>
    %16 = arith.negf %15 : vector<2x32xf32>
    %17 = math.exp %16 : vector<2x32xf32>
    %cst_13 = arith.constant 1.000000e+00 : f32
    %18 = vector.broadcast %cst_13 : f32 to vector<2x32xf32>
    %19 = arith.addf %18, %17 : vector<2x32xf32>
    %20 = arith.divf %18, %19 : vector<2x32xf32>
    %21 = vector.extract_strided_slice %14 {offsets = [0, 32], sizes = [2, 32], strides = [1, 1]} : vector<2x128xf32> to vector<2x32xf32>
    %22 = arith.negf %21 : vector<2x32xf32>
    %23 = math.exp %22 : vector<2x32xf32>
    %cst_14 = arith.constant 1.000000e+00 : f32
    %24 = vector.broadcast %cst_14 : f32 to vector<2x32xf32>
    %25 = arith.addf %24, %23 : vector<2x32xf32>
    %26 = arith.divf %24, %25 : vector<2x32xf32>
    %27 = vector.extract_strided_slice %14 {offsets = [0, 64], sizes = [2, 32], strides = [1, 1]} : vector<2x128xf32> to vector<2x32xf32>
    %28 = math.tanh %27 : vector<2x32xf32>
    %29 = vector.extract_strided_slice %14 {offsets = [0, 96], sizes = [2, 32], strides = [1, 1]} : vector<2x128xf32> to vector<2x32xf32>
    %30 = arith.negf %29 : vector<2x32xf32>
    %31 = math.exp %30 : vector<2x32xf32>
    %cst_15 = arith.constant 1.000000e+00 : f32
    %32 = vector.broadcast %cst_15 : f32 to vector<2x32xf32>
    %33 = arith.addf %32, %31 : vector<2x32xf32>
    %34 = arith.divf %32, %33 : vector<2x32xf32>
    %35 = arith.mulf %26, %9 : vector<2x32xf32>
    %36 = arith.mulf %20, %28 : vector<2x32xf32>
    %37 = arith.addf %35, %36 : vector<2x32xf32>
    %38 = math.tanh %37 : vector<2x32xf32>
    %39 = arith.mulf %34, %38 : vector<2x32xf32>
    %40 = arith.index_cast %10 : i32 to index
    %c0_16 = arith.constant 0 : index
    %41 = vector.load %arg15[%40, %c0_16] : memref<16x32xf32, #tpu.memory_space<vmem>>, vector<2x32xf32>
    tpu.vector_store %arg15[%40, %c0_16], %39 {strides = array<i32>} : memref<16x32xf32, #tpu.memory_space<vmem>>, vector<2x32xf32>,
    %c1_i32 = arith.constant 1 : i32
    %c2_i32_17 = arith.constant 2 : i32
    %42 = arith.muli %c1_i32, %c2_i32_17 : i32
    %43 = arith.index_cast %42 : i32 to index
    %c0_18 = arith.constant 0 : index
    %44 = vector.load %arg14[%43, %c0_18] : memref<16x128xf32, #tpu.memory_space<vmem>>, vector<2x128xf32>
    %cst_19 = arith.constant dense<0.000000e+00> : vector<2x128xf32>
    %45 = tpu.matmul %39, %7, %cst_19 {dimension_numbers = #tpu.dot_dimension_numbers<[1], [0], [0], [1], [0, 0, 1, 1], [], []>} : vector<2x32xf32>, vector<32x128xf32>, vector<2x128xf32> -> vector<2x128xf32>
    %46 = arith.addf %44, %45 : vector<2x128xf32>
    %47 = vector.extract_strided_slice %46 {offsets = [0, 0], sizes = [2, 32], strides = [1, 1]} : vector<2x128xf32> to vector<2x32xf32>
    %48 = arith.negf %47 : vector<2x32xf32>
    %49 = math.exp %48 : vector<2x32xf32>
    %cst_20 = arith.constant 1.000000e+00 : f32
    %50 = vector.broadcast %cst_20 : f32 to vector<2x32xf32>
    %51 = arith.addf %50, %49 : vector<2x32xf32>
    %52 = arith.divf %50, %51 : vector<2x32xf32>
    %53 = vector.extract_strided_slice %46 {offsets = [0, 32], sizes = [2, 32], strides = [1, 1]} : vector<2x128xf32> to vector<2x32xf32>
    %54 = arith.negf %53 : vector<2x32xf32>
    %55 = math.exp %54 : vector<2x32xf32>
    %cst_21 = arith.constant 1.000000e+00 : f32
    %56 = vector.broadcast %cst_21 : f32 to vector<2x32xf32>
    %57 = arith.addf %56, %55 : vector<2x32xf32>
    %58 = arith.divf %56, %57 : vector<2x32xf32>
    %59 = vector.extract_strided_slice %46 {offsets = [0, 64], sizes = [2, 32], strides = [1, 1]} : vector<2x128xf32> to vector<2x32xf32>
    %60 = math.tanh %59 : vector<2x32xf32>
    %61 = vector.extract_strided_slice %46 {offsets = [0, 96], sizes = [2, 32], strides = [1, 1]} : vector<2x128xf32> to vector<2x32xf32>
    %62 = arith.negf %61 : vector<2x32xf32>
    %63 = math.exp %62 : vector<2x32xf32>
    %cst_22 = arith.constant 1.000000e+00 : f32
    %64 = vector.broadcast %cst_22 : f32 to vector<2x32xf32>
    %65 = arith.addf %64, %63 : vector<2x32xf32>
    %66 = arith.divf %64, %65 : vector<2x32xf32>
    %67 = arith.mulf %58, %37 : vector<2x32xf32>
    %68 = arith.mulf %52, %60 : vector<2x32xf32>
    %69 = arith.addf %67, %68 : vector<2x32xf32>
    %70 = math.tanh %69 : vector<2x32xf32>
    %71 = arith.mulf %66, %70 : vector<2x32xf32>
    %72 = arith.index_cast %42 : i32 to index
    %c0_23 = arith.constant 0 : index
    %73 = vector.load %arg15[%72, %c0_23] : memref<16x32xf32, #tpu.memory_space<vmem>>, vector<2x32xf32>
    tpu.vector_store %arg15[%72, %c0_23], %71 {strides = array<i32>} : memref<16x32xf32, #tpu.memory_space<vmem>>, vector<2x32xf32>,
    %c2_i32_24 = arith.constant 2 : i32
    %c2_i32_25 = arith.constant 2 : i32
    %74 = arith.muli %c2_i32_24, %c2_i32_25 : i32
    %75 = arith.index_cast %74 : i32 to index
    %c0_26 = arith.constant 0 : index
    %76 = vector.load %arg14[%75, %c0_26] : memref<16x128xf32, #tpu.memory_space<vmem>>, vector<2x128xf32>
    %cst_27 = arith.constant dense<0.000000e+00> : vector<2x128xf32>
    %77 = tpu.matmul %71, %7, %cst_27 {dimension_numbers = #tpu.dot_dimension_numbers<[1], [0], [0], [1], [0, 0, 1, 1], [], []>} : vector<2x32xf32>, vector<32x128xf32>, vector<2x128xf32> -> vector<2x128xf32>
    %78 = arith.addf %76, %77 : vector<2x128xf32>
    %79 = vector.extract_strided_slice %78 {offsets = [0, 0], sizes = [2, 32], strides = [1, 1]} : vector<2x128xf32> to vector<2x32xf32>
    %80 = arith.negf %79 : vector<2x32xf32>
    %81 = math.exp %80 : vector<2x32xf32>
    %cst_28 = arith.constant 1.000000e+00 : f32
    %82 = vector.broadcast %cst_28 : f32 to vector<2x32xf32>
    %83 = arith.addf %82, %81 : vector<2x32xf32>
    %84 = arith.divf %82, %83 : vector<2x32xf32>
    %85 = vector.extract_strided_slice %78 {offsets = [0, 32], sizes = [2, 32], strides = [1, 1]} : vector<2x128xf32> to vector<2x32xf32>
    %86 = arith.negf %85 : vector<2x32xf32>
    %87 = math.exp %86 : vector<2x32xf32>
    %cst_29 = arith.constant 1.000000e+00 : f32
    %88 = vector.broadcast %cst_29 : f32 to vector<2x32xf32>
    %89 = arith.addf %88, %87 : vector<2x32xf32>
    %90 = arith.divf %88, %89 : vector<2x32xf32>
    %91 = vector.extract_strided_slice %78 {offsets = [0, 64], sizes = [2, 32], strides = [1, 1]} : vector<2x128xf32> to vector<2x32xf32>
    %92 = math.tanh %91 : vector<2x32xf32>
    %93 = vector.extract_strided_slice %78 {offsets = [0, 96], sizes = [2, 32], strides = [1, 1]} : vector<2x128xf32> to vector<2x32xf32>
    %94 = arith.negf %93 : vector<2x32xf32>
    %95 = math.exp %94 : vector<2x32xf32>
    %cst_30 = arith.constant 1.000000e+00 : f32
    %96 = vector.broadcast %cst_30 : f32 to vector<2x32xf32>
    %97 = arith.addf %96, %95 : vector<2x32xf32>
    %98 = arith.divf %96, %97 : vector<2x32xf32>
    %99 = arith.mulf %90, %69 : vector<2x32xf32>
    %100 = arith.mulf %84, %92 : vector<2x32xf32>
    %101 = arith.addf %99, %100 : vector<2x32xf32>
    %102 = math.tanh %101 : vector<2x32xf32>
    %103 = arith.mulf %98, %102 : vector<2x32xf32>
    %104 = arith.index_cast %74 : i32 to index
    %c0_31 = arith.constant 0 : index
    %105 = vector.load %arg15[%104, %c0_31] : memref<16x32xf32, #tpu.memory_space<vmem>>, vector<2x32xf32>
    tpu.vector_store %arg15[%104, %c0_31], %103 {strides = array<i32>} : memref<16x32xf32, #tpu.memory_space<vmem>>, vector<2x32xf32>,
    %c3_i32 = arith.constant 3 : i32
    %c2_i32_32 = arith.constant 2 : i32
    %106 = arith.muli %c3_i32, %c2_i32_32 : i32
    %107 = arith.index_cast %106 : i32 to index
    %c0_33 = arith.constant 0 : index
    %108 = vector.load %arg14[%107, %c0_33] : memref<16x128xf32, #tpu.memory_space<vmem>>, vector<2x128xf32>
    %cst_34 = arith.constant dense<0.000000e+00> : vector<2x128xf32>
    %109 = tpu.matmul %103, %7, %cst_34 {dimension_numbers = #tpu.dot_dimension_numbers<[1], [0], [0], [1], [0, 0, 1, 1], [], []>} : vector<2x32xf32>, vector<32x128xf32>, vector<2x128xf32> -> vector<2x128xf32>
    %110 = arith.addf %108, %109 : vector<2x128xf32>
    %111 = vector.extract_strided_slice %110 {offsets = [0, 0], sizes = [2, 32], strides = [1, 1]} : vector<2x128xf32> to vector<2x32xf32>
    %112 = arith.negf %111 : vector<2x32xf32>
    %113 = math.exp %112 : vector<2x32xf32>
    %cst_35 = arith.constant 1.000000e+00 : f32
    %114 = vector.broadcast %cst_35 : f32 to vector<2x32xf32>
    %115 = arith.addf %114, %113 : vector<2x32xf32>
    %116 = arith.divf %114, %115 : vector<2x32xf32>
    %117 = vector.extract_strided_slice %110 {offsets = [0, 32], sizes = [2, 32], strides = [1, 1]} : vector<2x128xf32> to vector<2x32xf32>
    %118 = arith.negf %117 : vector<2x32xf32>
    %119 = math.exp %118 : vector<2x32xf32>
    %cst_36 = arith.constant 1.000000e+00 : f32
    %120 = vector.broadcast %cst_36 : f32 to vector<2x32xf32>
    %121 = arith.addf %120, %119 : vector<2x32xf32>
    %122 = arith.divf %120, %121 : vector<2x32xf32>
    %123 = vector.extract_strided_slice %110 {offsets = [0, 64], sizes = [2, 32], strides = [1, 1]} : vector<2x128xf32> to vector<2x32xf32>
    %124 = math.tanh %123 : vector<2x32xf32>
    %125 = vector.extract_strided_slice %110 {offsets = [0, 96], sizes = [2, 32], strides = [1, 1]} : vector<2x128xf32> to vector<2x32xf32>
    %126 = arith.negf %125 : vector<2x32xf32>
    %127 = math.exp %126 : vector<2x32xf32>
    %cst_37 = arith.constant 1.000000e+00 : f32
    %128 = vector.broadcast %cst_37 : f32 to vector<2x32xf32>
    %129 = arith.addf %128, %127 : vector<2x32xf32>
    %130 = arith.divf %128, %129 : vector<2x32xf32>
    %131 = arith.mulf %122, %101 : vector<2x32xf32>
    %132 = arith.mulf %116, %124 : vector<2x32xf32>
    %133 = arith.addf %131, %132 : vector<2x32xf32>
    %134 = math.tanh %133 : vector<2x32xf32>
    %135 = arith.mulf %130, %134 : vector<2x32xf32>
    %136 = arith.index_cast %106 : i32 to index
    %c0_38 = arith.constant 0 : index
    %137 = vector.load %arg15[%136, %c0_38] : memref<16x32xf32, #tpu.memory_space<vmem>>, vector<2x32xf32>
    tpu.vector_store %arg15[%136, %c0_38], %135 {strides = array<i32>} : memref<16x32xf32, #tpu.memory_space<vmem>>, vector<2x32xf32>,
    %c4_i32 = arith.constant 4 : i32
    %c2_i32_39 = arith.constant 2 : i32
    %138 = arith.muli %c4_i32, %c2_i32_39 : i32
    %139 = arith.index_cast %138 : i32 to index
    %c0_40 = arith.constant 0 : index
    %140 = vector.load %arg14[%139, %c0_40] : memref<16x128xf32, #tpu.memory_space<vmem>>, vector<2x128xf32>
    %cst_41 = arith.constant dense<0.000000e+00> : vector<2x128xf32>
    %141 = tpu.matmul %135, %7, %cst_41 {dimension_numbers = #tpu.dot_dimension_numbers<[1], [0], [0], [1], [0, 0, 1, 1], [], []>} : vector<2x32xf32>, vector<32x128xf32>, vector<2x128xf32> -> vector<2x128xf32>
    %142 = arith.addf %140, %141 : vector<2x128xf32>
    %143 = vector.extract_strided_slice %142 {offsets = [0, 0], sizes = [2, 32], strides = [1, 1]} : vector<2x128xf32> to vector<2x32xf32>
    %144 = arith.negf %143 : vector<2x32xf32>
    %145 = math.exp %144 : vector<2x32xf32>
    %cst_42 = arith.constant 1.000000e+00 : f32
    %146 = vector.broadcast %cst_42 : f32 to vector<2x32xf32>
    %147 = arith.addf %146, %145 : vector<2x32xf32>
    %148 = arith.divf %146, %147 : vector<2x32xf32>
    %149 = vector.extract_strided_slice %142 {offsets = [0, 32], sizes = [2, 32], strides = [1, 1]} : vector<2x128xf32> to vector<2x32xf32>
    %150 = arith.negf %149 : vector<2x32xf32>
    %151 = math.exp %150 : vector<2x32xf32>
    %cst_43 = arith.constant 1.000000e+00 : f32
    %152 = vector.broadcast %cst_43 : f32 to vector<2x32xf32>
    %153 = arith.addf %152, %151 : vector<2x32xf32>
    %154 = arith.divf %152, %153 : vector<2x32xf32>
    %155 = vector.extract_strided_slice %142 {offsets = [0, 64], sizes = [2, 32], strides = [1, 1]} : vector<2x128xf32> to vector<2x32xf32>
    %156 = math.tanh %155 : vector<2x32xf32>
    %157 = vector.extract_strided_slice %142 {offsets = [0, 96], sizes = [2, 32], strides = [1, 1]} : vector<2x128xf32> to vector<2x32xf32>
    %158 = arith.negf %157 : vector<2x32xf32>
    %159 = math.exp %158 : vector<2x32xf32>
    %cst_44 = arith.constant 1.000000e+00 : f32
    %160 = vector.broadcast %cst_44 : f32 to vector<2x32xf32>
    %161 = arith.addf %160, %159 : vector<2x32xf32>
    %162 = arith.divf %160, %161 : vector<2x32xf32>
    %163 = arith.mulf %154, %133 : vector<2x32xf32>
    %164 = arith.mulf %148, %156 : vector<2x32xf32>
    %165 = arith.addf %163, %164 : vector<2x32xf32>
    %166 = math.tanh %165 : vector<2x32xf32>
    %167 = arith.mulf %162, %166 : vector<2x32xf32>
    %168 = arith.index_cast %138 : i32 to index
    %c0_45 = arith.constant 0 : index
    %169 = vector.load %arg15[%168, %c0_45] : memref<16x32xf32, #tpu.memory_space<vmem>>, vector<2x32xf32>
    tpu.vector_store %arg15[%168, %c0_45], %167 {strides = array<i32>} : memref<16x32xf32, #tpu.memory_space<vmem>>, vector<2x32xf32>,
    %c5_i32 = arith.constant 5 : i32
    %c2_i32_46 = arith.constant 2 : i32
    %170 = arith.muli %c5_i32, %c2_i32_46 : i32
    %171 = arith.index_cast %170 : i32 to index
    %c0_47 = arith.constant 0 : index
    %172 = vector.load %arg14[%171, %c0_47] : memref<16x128xf32, #tpu.memory_space<vmem>>, vector<2x128xf32>
    %cst_48 = arith.constant dense<0.000000e+00> : vector<2x128xf32>
    %173 = tpu.matmul %167, %7, %cst_48 {dimension_numbers = #tpu.dot_dimension_numbers<[1], [0], [0], [1], [0, 0, 1, 1], [], []>} : vector<2x32xf32>, vector<32x128xf32>, vector<2x128xf32> -> vector<2x128xf32>
    %174 = arith.addf %172, %173 : vector<2x128xf32>
    %175 = vector.extract_strided_slice %174 {offsets = [0, 0], sizes = [2, 32], strides = [1, 1]} : vector<2x128xf32> to vector<2x32xf32>
    %176 = arith.negf %175 : vector<2x32xf32>
    %177 = math.exp %176 : vector<2x32xf32>
    %cst_49 = arith.constant 1.000000e+00 : f32
    %178 = vector.broadcast %cst_49 : f32 to vector<2x32xf32>
    %179 = arith.addf %178, %177 : vector<2x32xf32>
    %180 = arith.divf %178, %179 : vector<2x32xf32>
    %181 = vector.extract_strided_slice %174 {offsets = [0, 32], sizes = [2, 32], strides = [1, 1]} : vector<2x128xf32> to vector<2x32xf32>
    %182 = arith.negf %181 : vector<2x32xf32>
    %183 = math.exp %182 : vector<2x32xf32>
    %cst_50 = arith.constant 1.000000e+00 : f32
    %184 = vector.broadcast %cst_50 : f32 to vector<2x32xf32>
    %185 = arith.addf %184, %183 : vector<2x32xf32>
    %186 = arith.divf %184, %185 : vector<2x32xf32>
    %187 = vector.extract_strided_slice %174 {offsets = [0, 64], sizes = [2, 32], strides = [1, 1]} : vector<2x128xf32> to vector<2x32xf32>
    %188 = math.tanh %187 : vector<2x32xf32>
    %189 = vector.extract_strided_slice %174 {offsets = [0, 96], sizes = [2, 32], strides = [1, 1]} : vector<2x128xf32> to vector<2x32xf32>
    %190 = arith.negf %189 : vector<2x32xf32>
    %191 = math.exp %190 : vector<2x32xf32>
    %cst_51 = arith.constant 1.000000e+00 : f32
    %192 = vector.broadcast %cst_51 : f32 to vector<2x32xf32>
    %193 = arith.addf %192, %191 : vector<2x32xf32>
    %194 = arith.divf %192, %193 : vector<2x32xf32>
    %195 = arith.mulf %186, %165 : vector<2x32xf32>
    %196 = arith.mulf %180, %188 : vector<2x32xf32>
    %197 = arith.addf %195, %196 : vector<2x32xf32>
    %198 = math.tanh %197 : vector<2x32xf32>
    %199 = arith.mulf %194, %198 : vector<2x32xf32>
    %200 = arith.index_cast %170 : i32 to index
    %c0_52 = arith.constant 0 : index
    %201 = vector.load %arg15[%200, %c0_52] : memref<16x32xf32, #tpu.memory_space<vmem>>, vector<2x32xf32>
    tpu.vector_store %arg15[%200, %c0_52], %199 {strides = array<i32>} : memref<16x32xf32, #tpu.memory_space<vmem>>, vector<2x32xf32>,
    %c6_i32 = arith.constant 6 : i32
    %c2_i32_53 = arith.constant 2 : i32
    %202 = arith.muli %c6_i32, %c2_i32_53 : i32
    %203 = arith.index_cast %202 : i32 to index
    %c0_54 = arith.constant 0 : index
    %204 = vector.load %arg14[%203, %c0_54] : memref<16x128xf32, #tpu.memory_space<vmem>>, vector<2x128xf32>
    %cst_55 = arith.constant dense<0.000000e+00> : vector<2x128xf32>
    %205 = tpu.matmul %199, %7, %cst_55 {dimension_numbers = #tpu.dot_dimension_numbers<[1], [0], [0], [1], [0, 0, 1, 1], [], []>} : vector<2x32xf32>, vector<32x128xf32>, vector<2x128xf32> -> vector<2x128xf32>
    %206 = arith.addf %204, %205 : vector<2x128xf32>
    %207 = vector.extract_strided_slice %206 {offsets = [0, 0], sizes = [2, 32], strides = [1, 1]} : vector<2x128xf32> to vector<2x32xf32>
    %208 = arith.negf %207 : vector<2x32xf32>
    %209 = math.exp %208 : vector<2x32xf32>
    %cst_56 = arith.constant 1.000000e+00 : f32
    %210 = vector.broadcast %cst_56 : f32 to vector<2x32xf32>
    %211 = arith.addf %210, %209 : vector<2x32xf32>
    %212 = arith.divf %210, %211 : vector<2x32xf32>
    %213 = vector.extract_strided_slice %206 {offsets = [0, 32], sizes = [2, 32], strides = [1, 1]} : vector<2x128xf32> to vector<2x32xf32>
    %214 = arith.negf %213 : vector<2x32xf32>
    %215 = math.exp %214 : vector<2x32xf32>
    %cst_57 = arith.constant 1.000000e+00 : f32
    %216 = vector.broadcast %cst_57 : f32 to vector<2x32xf32>
    %217 = arith.addf %216, %215 : vector<2x32xf32>
    %218 = arith.divf %216, %217 : vector<2x32xf32>
    %219 = vector.extract_strided_slice %206 {offsets = [0, 64], sizes = [2, 32], strides = [1, 1]} : vector<2x128xf32> to vector<2x32xf32>
    %220 = math.tanh %219 : vector<2x32xf32>
    %221 = vector.extract_strided_slice %206 {offsets = [0, 96], sizes = [2, 32], strides = [1, 1]} : vector<2x128xf32> to vector<2x32xf32>
    %222 = arith.negf %221 : vector<2x32xf32>
    %223 = math.exp %222 : vector<2x32xf32>
    %cst_58 = arith.constant 1.000000e+00 : f32
    %224 = vector.broadcast %cst_58 : f32 to vector<2x32xf32>
    %225 = arith.addf %224, %223 : vector<2x32xf32>
    %226 = arith.divf %224, %225 : vector<2x32xf32>
    %227 = arith.mulf %218, %197 : vector<2x32xf32>
    %228 = arith.mulf %212, %220 : vector<2x32xf32>
    %229 = arith.addf %227, %228 : vector<2x32xf32>
    %230 = math.tanh %229 : vector<2x32xf32>
    %231 = arith.mulf %226, %230 : vector<2x32xf32>
    %232 = arith.index_cast %202 : i32 to index
    %c0_59 = arith.constant 0 : index
    %233 = vector.load %arg15[%232, %c0_59] : memref<16x32xf32, #tpu.memory_space<vmem>>, vector<2x32xf32>
    tpu.vector_store %arg15[%232, %c0_59], %231 {strides = array<i32>} : memref<16x32xf32, #tpu.memory_space<vmem>>, vector<2x32xf32>,
    %c7_i32 = arith.constant 7 : i32
    %c2_i32_60 = arith.constant 2 : i32
    %234 = arith.muli %c7_i32, %c2_i32_60 : i32
    %235 = arith.index_cast %234 : i32 to index
    %c0_61 = arith.constant 0 : index
    %236 = vector.load %arg14[%235, %c0_61] : memref<16x128xf32, #tpu.memory_space<vmem>>, vector<2x128xf32>
    %cst_62 = arith.constant dense<0.000000e+00> : vector<2x128xf32>
    %237 = tpu.matmul %231, %7, %cst_62 {dimension_numbers = #tpu.dot_dimension_numbers<[1], [0], [0], [1], [0, 0, 1, 1], [], []>} : vector<2x32xf32>, vector<32x128xf32>, vector<2x128xf32> -> vector<2x128xf32>
    %238 = arith.addf %236, %237 : vector<2x128xf32>
    %239 = vector.extract_strided_slice %238 {offsets = [0, 0], sizes = [2, 32], strides = [1, 1]} : vector<2x128xf32> to vector<2x32xf32>
    %240 = arith.negf %239 : vector<2x32xf32>
    %241 = math.exp %240 : vector<2x32xf32>
    %cst_63 = arith.constant 1.000000e+00 : f32
    %242 = vector.broadcast %cst_63 : f32 to vector<2x32xf32>
    %243 = arith.addf %242, %241 : vector<2x32xf32>
    %244 = arith.divf %242, %243 : vector<2x32xf32>
    %245 = vector.extract_strided_slice %238 {offsets = [0, 32], sizes = [2, 32], strides = [1, 1]} : vector<2x128xf32> to vector<2x32xf32>
    %246 = arith.negf %245 : vector<2x32xf32>
    %247 = math.exp %246 : vector<2x32xf32>
    %cst_64 = arith.constant 1.000000e+00 : f32
    %248 = vector.broadcast %cst_64 : f32 to vector<2x32xf32>
    %249 = arith.addf %248, %247 : vector<2x32xf32>
    %250 = arith.divf %248, %249 : vector<2x32xf32>
    %251 = vector.extract_strided_slice %238 {offsets = [0, 64], sizes = [2, 32], strides = [1, 1]} : vector<2x128xf32> to vector<2x32xf32>
    %252 = math.tanh %251 : vector<2x32xf32>
    %253 = vector.extract_strided_slice %238 {offsets = [0, 96], sizes = [2, 32], strides = [1, 1]} : vector<2x128xf32> to vector<2x32xf32>
    %254 = arith.negf %253 : vector<2x32xf32>
    %255 = math.exp %254 : vector<2x32xf32>
    %cst_65 = arith.constant 1.000000e+00 : f32
    %256 = vector.broadcast %cst_65 : f32 to vector<2x32xf32>
    %257 = arith.addf %256, %255 : vector<2x32xf32>
    %258 = arith.divf %256, %257 : vector<2x32xf32>
    %259 = arith.mulf %250, %229 : vector<2x32xf32>
    %260 = arith.mulf %244, %252 : vector<2x32xf32>
    %261 = arith.addf %259, %260 : vector<2x32xf32>
    %262 = math.tanh %261 : vector<2x32xf32>
    %263 = arith.mulf %258, %262 : vector<2x32xf32>
    %264 = arith.index_cast %234 : i32 to index
    %c0_66 = arith.constant 0 : index
    %265 = vector.load %arg15[%264, %c0_66] : memref<16x32xf32, #tpu.memory_space<vmem>>, vector<2x32xf32>
    tpu.vector_store %arg15[%264, %c0_66], %263 {strides = array<i32>} : memref<16x32xf32, #tpu.memory_space<vmem>>, vector<2x32xf32>,
    %c8_i32 = arith.constant 8 : i32
    %c0_67 = arith.constant 0 : index
    %c0_68 = arith.constant 0 : index
    %c0_69 = arith.constant 0 : index
    %266 = vector.load %arg12[%c0_67, %c0_68, %c0_69] : memref<2x2x32xf32, #tpu.memory_space<vmem>>, vector<1x2x32xf32>
    %267 = vector.shape_cast %266 : vector<1x2x32xf32> to vector<2x32xf32>
    %268 = vector.shape_cast %263 : vector<2x32xf32> to vector<1x2x32xf32>
    tpu.vector_store %arg12[%c0_67, %c0_68, %c0_69], %268 {strides = array<i32>} : memref<2x2x32xf32, #tpu.memory_space<vmem>>, vector<1x2x32xf32>,
    %c0_70 = arith.constant 0 : index
    %c0_71 = arith.constant 0 : index
    %c0_72 = arith.constant 0 : index
    %269 = vector.load %arg13[%c0_70, %c0_71, %c0_72] : memref<2x2x32xf32, #tpu.memory_space<vmem>>, vector<1x2x32xf32>
    %270 = vector.shape_cast %269 : vector<1x2x32xf32> to vector<2x32xf32>
    %271 = vector.shape_cast %261 : vector<2x32xf32> to vector<1x2x32xf32>
    tpu.vector_store %arg13[%c0_70, %c0_71, %c0_72], %271 {strides = array<i32>} : memref<2x2x32xf32, #tpu.memory_space<vmem>>, vector<1x2x32xf32>,
    %c0_73 = arith.constant 0 : index
    %c0_74 = arith.constant 0 : index
    %272 = vector.load %arg15[%c0_73, %c0_74] : memref<16x32xf32, #tpu.memory_space<vmem>>, vector<16x32xf32>
    %c0_75 = arith.constant 0 : index
    %c0_76 = arith.constant 0 : index
    %273 = vector.load %arg4[%c0_75, %c0_76] : memref<32x128xf32, #tpu.memory_space<vmem>>, vector<32x128xf32>
    %cst_77 = arith.constant dense<0.000000e+00> : vector<16x128xf32>
    %274 = tpu.matmul %272, %273, %cst_77 {dimension_numbers = #tpu.dot_dimension_numbers<[1], [0], [0], [1], [0, 0, 1, 1], [], []>} : vector<16x32xf32>, vector<32x128xf32>, vector<16x128xf32> -> vector<16x128xf32>
    %c0_78 = arith.constant 0 : index
    %c0_79 = arith.constant 0 : index
    %275 = vector.load %arg6[%c0_78, %c0_79] : memref<1x128xf32, #tpu.memory_space<vmem>>, vector<1x128xf32>
    %276 = vector.broadcast %275 : vector<1x128xf32> to vector<16x128xf32>
    %277 = arith.addf %274, %276 : vector<16x128xf32>
    %c0_80 = arith.constant 0 : index
    %c0_81 = arith.constant 0 : index
    %278 = vector.load %arg14[%c0_80, %c0_81] : memref<16x128xf32, #tpu.memory_space<vmem>>, vector<16x128xf32>
    tpu.vector_store %arg14[%c0_80, %c0_81], %277 {strides = array<i32>} : memref<16x128xf32, #tpu.memory_space<vmem>>, vector<16x128xf32>,
    %c0_82 = arith.constant 0 : index
    %c0_83 = arith.constant 0 : index
    %279 = vector.load %arg5[%c0_82, %c0_83] : memref<32x128xf32, #tpu.memory_space<vmem>>, vector<32x128xf32>
    %cst_84 = arith.constant 0.000000e+00 : f32
    %280 = vector.broadcast %cst_84 : f32 to vector<2x32xf32>
    %cst_85 = arith.constant 0.000000e+00 : f32
    %281 = vector.broadcast %cst_85 : f32 to vector<2x32xf32>
    %c0_i32_86 = arith.constant 0 : i32
    %c2_i32_87 = arith.constant 2 : i32
    %282 = arith.muli %c0_i32_86, %c2_i32_87 : i32
    %283 = arith.index_cast %282 : i32 to index
    %c0_88 = arith.constant 0 : index
    %284 = vector.load %arg14[%283, %c0_88] : memref<16x128xf32, #tpu.memory_space<vmem>>, vector<2x128xf32>
    %cst_89 = arith.constant dense<0.000000e+00> : vector<2x128xf32>
    %285 = tpu.matmul %280, %279, %cst_89 {dimension_numbers = #tpu.dot_dimension_numbers<[1], [0], [0], [1], [0, 0, 1, 1], [], []>} : vector<2x32xf32>, vector<32x128xf32>, vector<2x128xf32> -> vector<2x128xf32>
    %286 = arith.addf %284, %285 : vector<2x128xf32>
    %287 = vector.extract_strided_slice %286 {offsets = [0, 0], sizes = [2, 32], strides = [1, 1]} : vector<2x128xf32> to vector<2x32xf32>
    %288 = arith.negf %287 : vector<2x32xf32>
    %289 = math.exp %288 : vector<2x32xf32>
    %cst_90 = arith.constant 1.000000e+00 : f32
    %290 = vector.broadcast %cst_90 : f32 to vector<2x32xf32>
    %291 = arith.addf %290, %289 : vector<2x32xf32>
    %292 = arith.divf %290, %291 : vector<2x32xf32>
    %293 = vector.extract_strided_slice %286 {offsets = [0, 32], sizes = [2, 32], strides = [1, 1]} : vector<2x128xf32> to vector<2x32xf32>
    %294 = arith.negf %293 : vector<2x32xf32>
    %295 = math.exp %294 : vector<2x32xf32>
    %cst_91 = arith.constant 1.000000e+00 : f32
    %296 = vector.broadcast %cst_91 : f32 to vector<2x32xf32>
    %297 = arith.addf %296, %295 : vector<2x32xf32>
    %298 = arith.divf %296, %297 : vector<2x32xf32>
    %299 = vector.extract_strided_slice %286 {offsets = [0, 64], sizes = [2, 32], strides = [1, 1]} : vector<2x128xf32> to vector<2x32xf32>
    %300 = math.tanh %299 : vector<2x32xf32>
    %301 = vector.extract_strided_slice %286 {offsets = [0, 96], sizes = [2, 32], strides = [1, 1]} : vector<2x128xf32> to vector<2x32xf32>
    %302 = arith.negf %301 : vector<2x32xf32>
    %303 = math.exp %302 : vector<2x32xf32>
    %cst_92 = arith.constant 1.000000e+00 : f32
    %304 = vector.broadcast %cst_92 : f32 to vector<2x32xf32>
    %305 = arith.addf %304, %303 : vector<2x32xf32>
    %306 = arith.divf %304, %305 : vector<2x32xf32>
    %307 = arith.mulf %298, %281 : vector<2x32xf32>
    %308 = arith.mulf %292, %300 : vector<2x32xf32>
    %309 = arith.addf %307, %308 : vector<2x32xf32>
    %310 = math.tanh %309 : vector<2x32xf32>
    %311 = arith.mulf %306, %310 : vector<2x32xf32>
    %c1_i32_93 = arith.constant 1 : i32
    %c2_i32_94 = arith.constant 2 : i32
    %312 = arith.muli %c1_i32_93, %c2_i32_94 : i32
    %313 = arith.index_cast %312 : i32 to index
    %c0_95 = arith.constant 0 : index
    %314 = vector.load %arg14[%313, %c0_95] : memref<16x128xf32, #tpu.memory_space<vmem>>, vector<2x128xf32>
    %cst_96 = arith.constant dense<0.000000e+00> : vector<2x128xf32>
    %315 = tpu.matmul %311, %279, %cst_96 {dimension_numbers = #tpu.dot_dimension_numbers<[1], [0], [0], [1], [0, 0, 1, 1], [], []>} : vector<2x32xf32>, vector<32x128xf32>, vector<2x128xf32> -> vector<2x128xf32>
    %316 = arith.addf %314, %315 : vector<2x128xf32>
    %317 = vector.extract_strided_slice %316 {offsets = [0, 0], sizes = [2, 32], strides = [1, 1]} : vector<2x128xf32> to vector<2x32xf32>
    %318 = arith.negf %317 : vector<2x32xf32>
    %319 = math.exp %318 : vector<2x32xf32>
    %cst_97 = arith.constant 1.000000e+00 : f32
    %320 = vector.broadcast %cst_97 : f32 to vector<2x32xf32>
    %321 = arith.addf %320, %319 : vector<2x32xf32>
    %322 = arith.divf %320, %321 : vector<2x32xf32>
    %323 = vector.extract_strided_slice %316 {offsets = [0, 32], sizes = [2, 32], strides = [1, 1]} : vector<2x128xf32> to vector<2x32xf32>
    %324 = arith.negf %323 : vector<2x32xf32>
    %325 = math.exp %324 : vector<2x32xf32>
    %cst_98 = arith.constant 1.000000e+00 : f32
    %326 = vector.broadcast %cst_98 : f32 to vector<2x32xf32>
    %327 = arith.addf %326, %325 : vector<2x32xf32>
    %328 = arith.divf %326, %327 : vector<2x32xf32>
    %329 = vector.extract_strided_slice %316 {offsets = [0, 64], sizes = [2, 32], strides = [1, 1]} : vector<2x128xf32> to vector<2x32xf32>
    %330 = math.tanh %329 : vector<2x32xf32>
    %331 = vector.extract_strided_slice %316 {offsets = [0, 96], sizes = [2, 32], strides = [1, 1]} : vector<2x128xf32> to vector<2x32xf32>
    %332 = arith.negf %331 : vector<2x32xf32>
    %333 = math.exp %332 : vector<2x32xf32>
    %cst_99 = arith.constant 1.000000e+00 : f32
    %334 = vector.broadcast %cst_99 : f32 to vector<2x32xf32>
    %335 = arith.addf %334, %333 : vector<2x32xf32>
    %336 = arith.divf %334, %335 : vector<2x32xf32>
    %337 = arith.mulf %328, %309 : vector<2x32xf32>
    %338 = arith.mulf %322, %330 : vector<2x32xf32>
    %339 = arith.addf %337, %338 : vector<2x32xf32>
    %340 = math.tanh %339 : vector<2x32xf32>
    %341 = arith.mulf %336, %340 : vector<2x32xf32>
    %c2_i32_100 = arith.constant 2 : i32
    %c2_i32_101 = arith.constant 2 : i32
    %342 = arith.muli %c2_i32_100, %c2_i32_101 : i32
    %343 = arith.index_cast %342 : i32 to index
    %c0_102 = arith.constant 0 : index
    %344 = vector.load %arg14[%343, %c0_102] : memref<16x128xf32, #tpu.memory_space<vmem>>, vector<2x128xf32>
    %cst_103 = arith.constant dense<0.000000e+00> : vector<2x128xf32>
    %345 = tpu.matmul %341, %279, %cst_103 {dimension_numbers = #tpu.dot_dimension_numbers<[1], [0], [0], [1], [0, 0, 1, 1], [], []>} : vector<2x32xf32>, vector<32x128xf32>, vector<2x128xf32> -> vector<2x128xf32>
    %346 = arith.addf %344, %345 : vector<2x128xf32>
    %347 = vector.extract_strided_slice %346 {offsets = [0, 0], sizes = [2, 32], strides = [1, 1]} : vector<2x128xf32> to vector<2x32xf32>
    %348 = arith.negf %347 : vector<2x32xf32>
    %349 = math.exp %348 : vector<2x32xf32>
    %cst_104 = arith.constant 1.000000e+00 : f32
    %350 = vector.broadcast %cst_104 : f32 to vector<2x32xf32>
    %351 = arith.addf %350, %349 : vector<2x32xf32>
    %352 = arith.divf %350, %351 : vector<2x32xf32>
    %353 = vector.extract_strided_slice %346 {offsets = [0, 32], sizes = [2, 32], strides = [1, 1]} : vector<2x128xf32> to vector<2x32xf32>
    %354 = arith.negf %353 : vector<2x32xf32>
    %355 = math.exp %354 : vector<2x32xf32>
    %cst_105 = arith.constant 1.000000e+00 : f32
    %356 = vector.broadcast %cst_105 : f32 to vector<2x32xf32>
    %357 = arith.addf %356, %355 : vector<2x32xf32>
    %358 = arith.divf %356, %357 : vector<2x32xf32>
    %359 = vector.extract_strided_slice %346 {offsets = [0, 64], sizes = [2, 32], strides = [1, 1]} : vector<2x128xf32> to vector<2x32xf32>
    %360 = math.tanh %359 : vector<2x32xf32>
    %361 = vector.extract_strided_slice %346 {offsets = [0, 96], sizes = [2, 32], strides = [1, 1]} : vector<2x128xf32> to vector<2x32xf32>
    %362 = arith.negf %361 : vector<2x32xf32>
    %363 = math.exp %362 : vector<2x32xf32>
    %cst_106 = arith.constant 1.000000e+00 : f32
    %364 = vector.broadcast %cst_106 : f32 to vector<2x32xf32>
    %365 = arith.addf %364, %363 : vector<2x32xf32>
    %366 = arith.divf %364, %365 : vector<2x32xf32>
    %367 = arith.mulf %358, %339 : vector<2x32xf32>
    %368 = arith.mulf %352, %360 : vector<2x32xf32>
    %369 = arith.addf %367, %368 : vector<2x32xf32>
    %370 = math.tanh %369 : vector<2x32xf32>
    %371 = arith.mulf %366, %370 : vector<2x32xf32>
    %c3_i32_107 = arith.constant 3 : i32
    %c2_i32_108 = arith.constant 2 : i32
    %372 = arith.muli %c3_i32_107, %c2_i32_108 : i32
    %373 = arith.index_cast %372 : i32 to index
    %c0_109 = arith.constant 0 : index
    %374 = vector.load %arg14[%373, %c0_109] : memref<16x128xf32, #tpu.memory_space<vmem>>, vector<2x128xf32>
    %cst_110 = arith.constant dense<0.000000e+00> : vector<2x128xf32>
    %375 = tpu.matmul %371, %279, %cst_110 {dimension_numbers = #tpu.dot_dimension_numbers<[1], [0], [0], [1], [0, 0, 1, 1], [], []>} : vector<2x32xf32>, vector<32x128xf32>, vector<2x128xf32> -> vector<2x128xf32>
    %376 = arith.addf %374, %375 : vector<2x128xf32>
    %377 = vector.extract_strided_slice %376 {offsets = [0, 0], sizes = [2, 32], strides = [1, 1]} : vector<2x128xf32> to vector<2x32xf32>
    %378 = arith.negf %377 : vector<2x32xf32>
    %379 = math.exp %378 : vector<2x32xf32>
    %cst_111 = arith.constant 1.000000e+00 : f32
    %380 = vector.broadcast %cst_111 : f32 to vector<2x32xf32>
    %381 = arith.addf %380, %379 : vector<2x32xf32>
    %382 = arith.divf %380, %381 : vector<2x32xf32>
    %383 = vector.extract_strided_slice %376 {offsets = [0, 32], sizes = [2, 32], strides = [1, 1]} : vector<2x128xf32> to vector<2x32xf32>
    %384 = arith.negf %383 : vector<2x32xf32>
    %385 = math.exp %384 : vector<2x32xf32>
    %cst_112 = arith.constant 1.000000e+00 : f32
    %386 = vector.broadcast %cst_112 : f32 to vector<2x32xf32>
    %387 = arith.addf %386, %385 : vector<2x32xf32>
    %388 = arith.divf %386, %387 : vector<2x32xf32>
    %389 = vector.extract_strided_slice %376 {offsets = [0, 64], sizes = [2, 32], strides = [1, 1]} : vector<2x128xf32> to vector<2x32xf32>
    %390 = math.tanh %389 : vector<2x32xf32>
    %391 = vector.extract_strided_slice %376 {offsets = [0, 96], sizes = [2, 32], strides = [1, 1]} : vector<2x128xf32> to vector<2x32xf32>
    %392 = arith.negf %391 : vector<2x32xf32>
    %393 = math.exp %392 : vector<2x32xf32>
    %cst_113 = arith.constant 1.000000e+00 : f32
    %394 = vector.broadcast %cst_113 : f32 to vector<2x32xf32>
    %395 = arith.addf %394, %393 : vector<2x32xf32>
    %396 = arith.divf %394, %395 : vector<2x32xf32>
    %397 = arith.mulf %388, %369 : vector<2x32xf32>
    %398 = arith.mulf %382, %390 : vector<2x32xf32>
    %399 = arith.addf %397, %398 : vector<2x32xf32>
    %400 = math.tanh %399 : vector<2x32xf32>
    %401 = arith.mulf %396, %400 : vector<2x32xf32>
    %c4_i32_114 = arith.constant 4 : i32
    %c2_i32_115 = arith.constant 2 : i32
    %402 = arith.muli %c4_i32_114, %c2_i32_115 : i32
    %403 = arith.index_cast %402 : i32 to index
    %c0_116 = arith.constant 0 : index
    %404 = vector.load %arg14[%403, %c0_116] : memref<16x128xf32, #tpu.memory_space<vmem>>, vector<2x128xf32>
    %cst_117 = arith.constant dense<0.000000e+00> : vector<2x128xf32>
    %405 = tpu.matmul %401, %279, %cst_117 {dimension_numbers = #tpu.dot_dimension_numbers<[1], [0], [0], [1], [0, 0, 1, 1], [], []>} : vector<2x32xf32>, vector<32x128xf32>, vector<2x128xf32> -> vector<2x128xf32>
    %406 = arith.addf %404, %405 : vector<2x128xf32>
    %407 = vector.extract_strided_slice %406 {offsets = [0, 0], sizes = [2, 32], strides = [1, 1]} : vector<2x128xf32> to vector<2x32xf32>
    %408 = arith.negf %407 : vector<2x32xf32>
    %409 = math.exp %408 : vector<2x32xf32>
    %cst_118 = arith.constant 1.000000e+00 : f32
    %410 = vector.broadcast %cst_118 : f32 to vector<2x32xf32>
    %411 = arith.addf %410, %409 : vector<2x32xf32>
    %412 = arith.divf %410, %411 : vector<2x32xf32>
    %413 = vector.extract_strided_slice %406 {offsets = [0, 32], sizes = [2, 32], strides = [1, 1]} : vector<2x128xf32> to vector<2x32xf32>
    %414 = arith.negf %413 : vector<2x32xf32>
    %415 = math.exp %414 : vector<2x32xf32>
    %cst_119 = arith.constant 1.000000e+00 : f32
    %416 = vector.broadcast %cst_119 : f32 to vector<2x32xf32>
    %417 = arith.addf %416, %415 : vector<2x32xf32>
    %418 = arith.divf %416, %417 : vector<2x32xf32>
    %419 = vector.extract_strided_slice %406 {offsets = [0, 64], sizes = [2, 32], strides = [1, 1]} : vector<2x128xf32> to vector<2x32xf32>
    %420 = math.tanh %419 : vector<2x32xf32>
    %421 = vector.extract_strided_slice %406 {offsets = [0, 96], sizes = [2, 32], strides = [1, 1]} : vector<2x128xf32> to vector<2x32xf32>
    %422 = arith.negf %421 : vector<2x32xf32>
    %423 = math.exp %422 : vector<2x32xf32>
    %cst_120 = arith.constant 1.000000e+00 : f32
    %424 = vector.broadcast %cst_120 : f32 to vector<2x32xf32>
    %425 = arith.addf %424, %423 : vector<2x32xf32>
    %426 = arith.divf %424, %425 : vector<2x32xf32>
    %427 = arith.mulf %418, %399 : vector<2x32xf32>
    %428 = arith.mulf %412, %420 : vector<2x32xf32>
    %429 = arith.addf %427, %428 : vector<2x32xf32>
    %430 = math.tanh %429 : vector<2x32xf32>
    %431 = arith.mulf %426, %430 : vector<2x32xf32>
    %c5_i32_121 = arith.constant 5 : i32
    %c2_i32_122 = arith.constant 2 : i32
    %432 = arith.muli %c5_i32_121, %c2_i32_122 : i32
    %433 = arith.index_cast %432 : i32 to index
    %c0_123 = arith.constant 0 : index
    %434 = vector.load %arg14[%433, %c0_123] : memref<16x128xf32, #tpu.memory_space<vmem>>, vector<2x128xf32>
    %cst_124 = arith.constant dense<0.000000e+00> : vector<2x128xf32>
    %435 = tpu.matmul %431, %279, %cst_124 {dimension_numbers = #tpu.dot_dimension_numbers<[1], [0], [0], [1], [0, 0, 1, 1], [], []>} : vector<2x32xf32>, vector<32x128xf32>, vector<2x128xf32> -> vector<2x128xf32>
    %436 = arith.addf %434, %435 : vector<2x128xf32>
    %437 = vector.extract_strided_slice %436 {offsets = [0, 0], sizes = [2, 32], strides = [1, 1]} : vector<2x128xf32> to vector<2x32xf32>
    %438 = arith.negf %437 : vector<2x32xf32>
    %439 = math.exp %438 : vector<2x32xf32>
    %cst_125 = arith.constant 1.000000e+00 : f32
    %440 = vector.broadcast %cst_125 : f32 to vector<2x32xf32>
    %441 = arith.addf %440, %439 : vector<2x32xf32>
    %442 = arith.divf %440, %441 : vector<2x32xf32>
    %443 = vector.extract_strided_slice %436 {offsets = [0, 32], sizes = [2, 32], strides = [1, 1]} : vector<2x128xf32> to vector<2x32xf32>
    %444 = arith.negf %443 : vector<2x32xf32>
    %445 = math.exp %444 : vector<2x32xf32>
    %cst_126 = arith.constant 1.000000e+00 : f32
    %446 = vector.broadcast %cst_126 : f32 to vector<2x32xf32>
    %447 = arith.addf %446, %445 : vector<2x32xf32>
    %448 = arith.divf %446, %447 : vector<2x32xf32>
    %449 = vector.extract_strided_slice %436 {offsets = [0, 64], sizes = [2, 32], strides = [1, 1]} : vector<2x128xf32> to vector<2x32xf32>
    %450 = math.tanh %449 : vector<2x32xf32>
    %451 = vector.extract_strided_slice %436 {offsets = [0, 96], sizes = [2, 32], strides = [1, 1]} : vector<2x128xf32> to vector<2x32xf32>
    %452 = arith.negf %451 : vector<2x32xf32>
    %453 = math.exp %452 : vector<2x32xf32>
    %cst_127 = arith.constant 1.000000e+00 : f32
    %454 = vector.broadcast %cst_127 : f32 to vector<2x32xf32>
    %455 = arith.addf %454, %453 : vector<2x32xf32>
    %456 = arith.divf %454, %455 : vector<2x32xf32>
    %457 = arith.mulf %448, %429 : vector<2x32xf32>
    %458 = arith.mulf %442, %450 : vector<2x32xf32>
    %459 = arith.addf %457, %458 : vector<2x32xf32>
    %460 = math.tanh %459 : vector<2x32xf32>
    %461 = arith.mulf %456, %460 : vector<2x32xf32>
    %c6_i32_128 = arith.constant 6 : i32
    %c2_i32_129 = arith.constant 2 : i32
    %462 = arith.muli %c6_i32_128, %c2_i32_129 : i32
    %463 = arith.index_cast %462 : i32 to index
    %c0_130 = arith.constant 0 : index
    %464 = vector.load %arg14[%463, %c0_130] : memref<16x128xf32, #tpu.memory_space<vmem>>, vector<2x128xf32>
    %cst_131 = arith.constant dense<0.000000e+00> : vector<2x128xf32>
    %465 = tpu.matmul %461, %279, %cst_131 {dimension_numbers = #tpu.dot_dimension_numbers<[1], [0], [0], [1], [0, 0, 1, 1], [], []>} : vector<2x32xf32>, vector<32x128xf32>, vector<2x128xf32> -> vector<2x128xf32>
    %466 = arith.addf %464, %465 : vector<2x128xf32>
    %467 = vector.extract_strided_slice %466 {offsets = [0, 0], sizes = [2, 32], strides = [1, 1]} : vector<2x128xf32> to vector<2x32xf32>
    %468 = arith.negf %467 : vector<2x32xf32>
    %469 = math.exp %468 : vector<2x32xf32>
    %cst_132 = arith.constant 1.000000e+00 : f32
    %470 = vector.broadcast %cst_132 : f32 to vector<2x32xf32>
    %471 = arith.addf %470, %469 : vector<2x32xf32>
    %472 = arith.divf %470, %471 : vector<2x32xf32>
    %473 = vector.extract_strided_slice %466 {offsets = [0, 32], sizes = [2, 32], strides = [1, 1]} : vector<2x128xf32> to vector<2x32xf32>
    %474 = arith.negf %473 : vector<2x32xf32>
    %475 = math.exp %474 : vector<2x32xf32>
    %cst_133 = arith.constant 1.000000e+00 : f32
    %476 = vector.broadcast %cst_133 : f32 to vector<2x32xf32>
    %477 = arith.addf %476, %475 : vector<2x32xf32>
    %478 = arith.divf %476, %477 : vector<2x32xf32>
    %479 = vector.extract_strided_slice %466 {offsets = [0, 64], sizes = [2, 32], strides = [1, 1]} : vector<2x128xf32> to vector<2x32xf32>
    %480 = math.tanh %479 : vector<2x32xf32>
    %481 = vector.extract_strided_slice %466 {offsets = [0, 96], sizes = [2, 32], strides = [1, 1]} : vector<2x128xf32> to vector<2x32xf32>
    %482 = arith.negf %481 : vector<2x32xf32>
    %483 = math.exp %482 : vector<2x32xf32>
    %cst_134 = arith.constant 1.000000e+00 : f32
    %484 = vector.broadcast %cst_134 : f32 to vector<2x32xf32>
    %485 = arith.addf %484, %483 : vector<2x32xf32>
    %486 = arith.divf %484, %485 : vector<2x32xf32>
    %487 = arith.mulf %478, %459 : vector<2x32xf32>
    %488 = arith.mulf %472, %480 : vector<2x32xf32>
    %489 = arith.addf %487, %488 : vector<2x32xf32>
    %490 = math.tanh %489 : vector<2x32xf32>
    %491 = arith.mulf %486, %490 : vector<2x32xf32>
    %c7_i32_135 = arith.constant 7 : i32
    %c2_i32_136 = arith.constant 2 : i32
    %492 = arith.muli %c7_i32_135, %c2_i32_136 : i32
    %493 = arith.index_cast %492 : i32 to index
    %c0_137 = arith.constant 0 : index
    %494 = vector.load %arg14[%493, %c0_137] : memref<16x128xf32, #tpu.memory_space<vmem>>, vector<2x128xf32>
    %cst_138 = arith.constant dense<0.000000e+00> : vector<2x128xf32>
    %495 = tpu.matmul %491, %279, %cst_138 {dimension_numbers = #tpu.dot_dimension_numbers<[1], [0], [0], [1], [0, 0, 1, 1], [], []>} : vector<2x32xf32>, vector<32x128xf32>, vector<2x128xf32> -> vector<2x128xf32>
    %496 = arith.addf %494, %495 : vector<2x128xf32>
    %497 = vector.extract_strided_slice %496 {offsets = [0, 0], sizes = [2, 32], strides = [1, 1]} : vector<2x128xf32> to vector<2x32xf32>
    %498 = arith.negf %497 : vector<2x32xf32>
    %499 = math.exp %498 : vector<2x32xf32>
    %cst_139 = arith.constant 1.000000e+00 : f32
    %500 = vector.broadcast %cst_139 : f32 to vector<2x32xf32>
    %501 = arith.addf %500, %499 : vector<2x32xf32>
    %502 = arith.divf %500, %501 : vector<2x32xf32>
    %503 = vector.extract_strided_slice %496 {offsets = [0, 32], sizes = [2, 32], strides = [1, 1]} : vector<2x128xf32> to vector<2x32xf32>
    %504 = arith.negf %503 : vector<2x32xf32>
    %505 = math.exp %504 : vector<2x32xf32>
    %cst_140 = arith.constant 1.000000e+00 : f32
    %506 = vector.broadcast %cst_140 : f32 to vector<2x32xf32>
    %507 = arith.addf %506, %505 : vector<2x32xf32>
    %508 = arith.divf %506, %507 : vector<2x32xf32>
    %509 = vector.extract_strided_slice %496 {offsets = [0, 64], sizes = [2, 32], strides = [1, 1]} : vector<2x128xf32> to vector<2x32xf32>
    %510 = math.tanh %509 : vector<2x32xf32>
    %511 = vector.extract_strided_slice %496 {offsets = [0, 96], sizes = [2, 32], strides = [1, 1]} : vector<2x128xf32> to vector<2x32xf32>
    %512 = arith.negf %511 : vector<2x32xf32>
    %513 = math.exp %512 : vector<2x32xf32>
    %cst_141 = arith.constant 1.000000e+00 : f32
    %514 = vector.broadcast %cst_141 : f32 to vector<2x32xf32>
    %515 = arith.addf %514, %513 : vector<2x32xf32>
    %516 = arith.divf %514, %515 : vector<2x32xf32>
    %517 = arith.mulf %508, %489 : vector<2x32xf32>
    %518 = arith.mulf %502, %510 : vector<2x32xf32>
    %519 = arith.addf %517, %518 : vector<2x32xf32>
    %520 = math.tanh %519 : vector<2x32xf32>
    %521 = arith.mulf %516, %520 : vector<2x32xf32>
    %c8_i32_142 = arith.constant 8 : i32
    %c1 = arith.constant 1 : index
    %c0_143 = arith.constant 0 : index
    %c0_144 = arith.constant 0 : index
    %522 = vector.load %arg12[%c1, %c0_143, %c0_144] : memref<2x2x32xf32, #tpu.memory_space<vmem>>, vector<1x2x32xf32>
    %523 = vector.shape_cast %522 : vector<1x2x32xf32> to vector<2x32xf32>
    %524 = vector.shape_cast %521 : vector<2x32xf32> to vector<1x2x32xf32>
    tpu.vector_store %arg12[%c1, %c0_143, %c0_144], %524 {strides = array<i32>} : memref<2x2x32xf32, #tpu.memory_space<vmem>>, vector<1x2x32xf32>,
    %c1_145 = arith.constant 1 : index
    %c0_146 = arith.constant 0 : index
    %c0_147 = arith.constant 0 : index
    %525 = vector.load %arg13[%c1_145, %c0_146, %c0_147] : memref<2x2x32xf32, #tpu.memory_space<vmem>>, vector<1x2x32xf32>
    %526 = vector.shape_cast %525 : vector<1x2x32xf32> to vector<2x32xf32>
    %527 = vector.shape_cast %519 : vector<2x32xf32> to vector<1x2x32xf32>
    tpu.vector_store %arg13[%c1_145, %c0_146, %c0_147], %527 {strides = array<i32>} : memref<2x2x32xf32, #tpu.memory_space<vmem>>, vector<1x2x32xf32>,
    %c0_148 = arith.constant 0 : index
    %c0_149 = arith.constant 0 : index
    %528 = vector.load %arg7[%c0_148, %c0_149] : memref<32x32xf32, #tpu.memory_space<vmem>>, vector<32x32xf32>
    %cst_150 = arith.constant dense<0.000000e+00> : vector<2x32xf32>
    %529 = tpu.matmul %521, %528, %cst_150 {dimension_numbers = #tpu.dot_dimension_numbers<[1], [0], [0], [1], [0, 0, 1, 1], [], []>} : vector<2x32xf32>, vector<32x32xf32>, vector<2x32xf32> -> vector<2x32xf32>
    %c0_151 = arith.constant 0 : index
    %c0_152 = arith.constant 0 : index
    %530 = vector.load %arg8[%c0_151, %c0_152] : memref<1x32xf32, #tpu.memory_space<vmem>>, vector<1x32xf32>
    %531 = vector.broadcast %530 : vector<1x32xf32> to vector<2x32xf32>
    %532 = arith.addf %529, %531 : vector<2x32xf32>
    %c0_153 = arith.constant 0 : index
    %c0_154 = arith.constant 0 : index
    %533 = vector.load %arg7[%c0_153, %c0_154] : memref<32x32xf32, #tpu.memory_space<vmem>>, vector<32x32xf32>
    %cst_155 = arith.constant dense<0.000000e+00> : vector<2x32xf32>
    %534 = tpu.matmul %532, %533, %cst_155 {dimension_numbers = #tpu.dot_dimension_numbers<[1], [0], [0], [1], [0, 0, 1, 1], [], []>} : vector<2x32xf32>, vector<32x32xf32>, vector<2x32xf32> -> vector<2x32xf32>
    %c0_156 = arith.constant 0 : index
    %c0_157 = arith.constant 0 : index
    %535 = vector.load %arg8[%c0_156, %c0_157] : memref<1x32xf32, #tpu.memory_space<vmem>>, vector<1x32xf32>
    %536 = vector.broadcast %535 : vector<1x32xf32> to vector<2x32xf32>
    %537 = arith.addf %534, %536 : vector<2x32xf32>
    %c0_158 = arith.constant 0 : index
    %c0_159 = arith.constant 0 : index
    %538 = vector.load %arg9[%c0_158, %c0_159] : memref<32x4xf32, #tpu.memory_space<vmem>>, vector<32x4xf32>
    %cst_160 = arith.constant dense<0.000000e+00> : vector<2x4xf32>
    %539 = tpu.matmul %537, %538, %cst_160 {dimension_numbers = #tpu.dot_dimension_numbers<[1], [0], [0], [1], [0, 0, 1, 1], [], []>} : vector<2x32xf32>, vector<32x4xf32>, vector<2x4xf32> -> vector<2x4xf32>
    %c0_161 = arith.constant 0 : index
    %c0_162 = arith.constant 0 : index
    %540 = vector.load %arg10[%c0_161, %c0_162] : memref<1x4xf32, #tpu.memory_space<vmem>>, vector<1x4xf32>
    %541 = vector.broadcast %540 : vector<1x4xf32> to vector<2x4xf32>
    %542 = arith.addf %539, %541 : vector<2x4xf32>
    %c0_163 = arith.constant 0 : index
    %c0_164 = arith.constant 0 : index
    %543 = vector.load %arg11[%c0_163, %c0_164] : memref<2x4xf32, #tpu.memory_space<vmem>>, vector<2x4xf32>
    tpu.vector_store %arg11[%c0_163, %c0_164], %542 {strides = array<i32>} : memref<2x4xf32, #tpu.memory_space<vmem>>, vector<2x4xf32>,
    return
  }
}

</mosaic_0001>

<llo_original>
// kernel: lstm_model_forward.1
$region0: #{lstm_model_forward.1}
  #allocation0 [shape = 'u32[]', space=smem, size = 0x4, offset = 0x4, fixed_abs, tag = 'smem constant byte address 0x4 - core index']
  #allocation1 [shape = 'u32[144,128]{1,0:T(1,128)}', space=vmem, size = 0x12000, scoped, tag = 'internal scratch']
  #allocation2 [shape = 'f32[16,128]{1,0:T(8,128)}', space=vmem, size = 0x2000, scoped, tag = 'scratch operand']
  #allocation3 [shape = 'f32[16,32]{1,0:T(8,128)}', space=vmem, size = 0x2000, scoped, tag = 'scratch operand']
  %s0 = inlined_call_operand.vmem [shape: f32[16,4], index: 0, kind: input, shape index: {}]
  %s1 = inlined_call_operand.vmem [shape: f32[4,128], index: 1, kind: input, shape index: {}]
  %s2 = inlined_call_operand.vmem [shape: f32[32,128], index: 2, kind: input, shape index: {}]
  %s3 = inlined_call_operand.vmem [shape: f32[1,128], index: 3, kind: input, shape index: {}]
  %s4 = inlined_call_operand.vmem [shape: f32[32,128], index: 4, kind: input, shape index: {}]
  %s5 = inlined_call_operand.vmem [shape: f32[32,128], index: 5, kind: input, shape index: {}]
  %s6 = inlined_call_operand.vmem [shape: f32[1,128], index: 6, kind: input, shape index: {}]
  %s7 = inlined_call_operand.vmem [shape: f32[32,32], index: 7, kind: input, shape index: {}]
  %s8 = inlined_call_operand.vmem [shape: f32[1,32], index: 8, kind: input, shape index: {}]
  %s9 = inlined_call_operand.vmem [shape: f32[32,4], index: 9, kind: input, shape index: {}]
  %s10 = inlined_call_operand.vmem [shape: f32[1,4], index: 10, kind: input, shape index: {}]
  %s11 = inlined_call_operand.hbm [shape: f32[2,4], index: 11, kind: output, shape index: {0}]
  %s12 = inlined_call_operand.hbm [shape: f32[2,2,32], index: 12, kind: output, shape index: {1}]
  %s13 = inlined_call_operand.hbm [shape: f32[2,2,32], index: 13, kind: output, shape index: {2}]
  %14 = xla_tuple %s11, %s12, %s13
  %s15 = sld [smem:[#allocation0]]
  $region70: #{lstm_model_forward.1} parent=0
    _
  %s17 = ssub.s32 1, %s15
  %s18 = scalar_select 0, %s17, %s15
  $region1: #{lstm_model_forward.1} parent=0
    #allocation4 [shape = 'u8[1024]{0}', space=vmem, size = 0x400, scoped, tag = 'output window, operand 0, single buffered']
    #allocation5 [shape = 's32[1]{0}', space=sflag, size = 0x4, scoped, tag = 'scoped memory for lstm_model_forward.1']
    #allocation6 [shape = 'u8[2048]{0}', space=vmem, size = 0x800, scoped, tag = 'output window, operand 1, single buffered']
    #allocation7 [shape = 's32[1]{0}', space=sflag, size = 0x4, scoped, tag = 'scoped memory for lstm_model_forward.1']
    #allocation8 [shape = 'u8[2048]{0}', space=vmem, size = 0x800, scoped, tag = 'output window, operand 2, single buffered']
    %19 = vsyncpa [#allocation5], 0
    %20 = vsyncpa [#allocation7], 0
    // Predicated region
    $region2: #{lstm_model_forward.1} parent=1 // pred_check
      _
    $region3: #{lstm_model_forward.1} parent=1 // pred_check_branch
      %22 = sbr.rel (0) target = $region5
    $region4: #{lstm_model_forward.1} parent=1 // pred_region
      _
    $region5: #{lstm_model_forward.1} parent=1 // pred_fallthru
      _
    // Predicated region
    $region6: #{lstm_model_forward.1} parent=1 // pred_check
      _
    $region7: #{lstm_model_forward.1} parent=1 // pred_check_branch
      %24 = sbr.rel (0) target = $region9
    $region8: #{lstm_model_forward.1} parent=1 // pred_region
      _
    $region9: #{lstm_model_forward.1} parent=1 // pred_fallthru
      _
    // Predicated region
    $region10: #{lstm_model_forward.1} parent=1 // pred_check
      _
    $region11: #{lstm_model_forward.1} parent=1 // pred_check_branch
      %26 = sbr.rel (0) target = $region13
    $region12: #{lstm_model_forward.1} parent=1 // pred_region
      _
    $region13: #{lstm_model_forward.1} parent=1 // pred_fallthru
      _
    // Predicated region
    $region14: #{lstm_model_forward.1} parent=1 // pred_check
      _
    $region15: #{lstm_model_forward.1} parent=1 // pred_check_branch
      %28 = sbr.rel (0) target = $region17
    $region16: #{lstm_model_forward.1} parent=1 // pred_region
      _
    $region17: #{lstm_model_forward.1} parent=1 // pred_fallthru
      _
    // Predicated region
    $region18: #{lstm_model_forward.1} parent=1 // pred_check
      _
    $region19: #{lstm_model_forward.1} parent=1 // pred_check_branch
      %30 = sbr.rel (0) target = $region21
    $region20: #{lstm_model_forward.1} parent=1 // pred_region
      _
    $region21: #{lstm_model_forward.1} parent=1 // pred_fallthru
      _
    // Predicated region
    $region22: #{lstm_model_forward.1} parent=1 // pred_check
      _
    $region23: #{lstm_model_forward.1} parent=1 // pred_check_branch
      %32 = sbr.rel (0) target = $region25
    $region24: #{lstm_model_forward.1} parent=1 // pred_region
      _
    $region25: #{lstm_model_forward.1} parent=1 // pred_fallthru
      _
    // Predicated region
    $region26: #{lstm_model_forward.1} parent=1 // pred_check
      _
    $region27: #{lstm_model_forward.1} parent=1 // pred_check_branch
      %34 = sbr.rel (0) target = $region29
    $region28: #{lstm_model_forward.1} parent=1 // pred_region
      _
    $region29: #{lstm_model_forward.1} parent=1 // pred_fallthru
      _
    // Predicated region
    $region30: #{lstm_model_forward.1} parent=1 // pred_check
      _
    $region31: #{lstm_model_forward.1} parent=1 // pred_check_branch
      %36 = sbr.rel (0) target = $region33
    $region32: #{lstm_model_forward.1} parent=1 // pred_region
      _
    $region33: #{lstm_model_forward.1} parent=1 // pred_fallthru
      _
    // Predicated region
    $region34: #{lstm_model_forward.1} parent=1 // pred_check
      _
    $region35: #{lstm_model_forward.1} parent=1 // pred_check_branch
      %38 = sbr.rel (0) target = $region37
    $region36: #{lstm_model_forward.1} parent=1 // pred_region
      _
    $region37: #{lstm_model_forward.1} parent=1 // pred_fallthru
      _
    // Predicated region
    $region38: #{lstm_model_forward.1} parent=1 // pred_check
      _
    $region39: #{lstm_model_forward.1} parent=1 // pred_check_branch
      %40 = sbr.rel (0) target = $region41
    $region40: #{lstm_model_forward.1} parent=1 // pred_region
      _
    $region41: #{lstm_model_forward.1} parent=1 // pred_fallthru
      _
    // Predicated region
    $region42: #{lstm_model_forward.1} parent=1 // pred_check
      _
    $region43: #{lstm_model_forward.1} parent=1 // pred_check_branch
      %42 = sbr.rel (0) target = $region45
    $region44: #{lstm_model_forward.1} parent=1 // pred_region
      _
    $region45: #{lstm_model_forward.1} parent=1 // pred_fallthru
      _
    %v43 = vld [vmem:[%s0] sm:$0xff]
    %v44 = vld [vmem:[%s0 + $0x8] sm:$0xff]
    %v45 = vld [vmem:[%s1] sm:$0xf]
    %v46 = vld [vmem:[%s3] sm:$0x1]
    %v48 = vlaneseq
    %v49 = vshrl.u32 %v48, 7
    %v50 = vsub.s32 0, %v49
    %v51 = vrot.slane %v46, %v50
    %vm53 = vcmask 31744
    %v55 = vsel %vm53, %v43, 0
    %v58 = vsel %vm53, %v44, 0
    %vm60 = vcmask 1043456
    %v62 = vsel %vm60, %v45, 0
    %64 = vmatprep.subr.mxu0 0.0
    %65 = vmatpush1.msra.mxu0 %v62
    %66 = vmatprep.subr.mxu0 0.0
    %67 = vmatpush1.msra.mxu0 0.0
    %68 = vmatprep.subr.mxu0 0.0
    %69 = vmatpush1.msra.mxu0 0.0
    %70 = vmatprep.subr.mxu0 0.0
    %71 = vmatpush1.msra.mxu0 0.0
    %72 = vmatprep.subr.mxu0 0.0
    %73 = vmatpush1.msra.mxu0 0.0
    %74 = vmatprep.subr.mxu0 0.0
    %75 = vmatpush1.msra.mxu0 0.0
    %76 = vmatprep.subr.mxu0 0.0
    %77 = vmatpush1.msra.mxu0 0.0
    %78 = vmatprep.subr.mxu0 0.0
    %79 = vmatpush1.msra.mxu0 0.0
    %80 = vmatprep.subr.mxu0 0.0
    %81 = vmatpush1.msra.mxu0 0.0
    %82 = vmatprep.subr.mxu0 0.0
    %83 = vmatpush1.msra.mxu0 0.0
    %84 = vmatprep.subr.mxu0 0.0
    %85 = vmatpush1.msra.mxu0 0.0
    %86 = vmatprep.subr.mxu0 0.0
    %87 = vmatpush1.msra.mxu0 0.0
    %88 = vmatprep.subr.mxu0 0.0
    %89 = vmatpush1.msra.mxu0 0.0
    %90 = vmatprep.subr.mxu0 0.0
    %91 = vmatpush1.msra.mxu0 0.0
    %92 = vmatprep.subr.mxu0 0.0
    %93 = vmatpush1.msra.mxu0 0.0
    %94 = vmatprep.subr.mxu0 0.0
    %95 = vmatpush1.msra.mxu0 0.0
    %96 = vmatprep.subr.mxu0 0.0
    %97 = vmatpush1.msra.mxu0 0.0
    %98 = vmatprep.subr.mxu0 0.0
    %99 = vmatpush1.msra.mxu0 0.0
    %100 = vmatprep.subr.mxu0 0.0
    %101 = vmatpush1.msra.mxu0 0.0
    %102 = vmatprep.subr.mxu0 0.0
    %103 = vmatpush1.msra.mxu0 0.0
    %104 = vmatprep.subr.mxu0 0.0
    %105 = vmatpush1.msra.mxu0 0.0
    %106 = vmatprep.subr.mxu0 0.0
    %107 = vmatpush1.msra.mxu0 0.0
    %108 = vmatprep.subr.mxu0 0.0
    %109 = vmatpush1.msra.mxu0 0.0
    %110 = vmatprep.subr.mxu0 0.0
    %111 = vmatpush1.msra.mxu0 0.0
    %112 = vmatprep.subr.mxu0 0.0
    %113 = vmatpush1.msra.mxu0 0.0
    %114 = vmatprep.subr.mxu0 0.0
    %115 = vmatpush1.msra.mxu0 0.0
    %116 = vmatprep.subr.mxu0 0.0
    %117 = vmatpush1.msra.mxu0 0.0
    %118 = vmatprep.subr.mxu0 0.0
    %119 = vmatpush1.msra.mxu0 0.0
    %120 = vmatprep.subr.mxu0 0.0
    %121 = vmatpush1.msra.mxu0 0.0
    %122 = vmatprep.subr.mxu0 0.0
    %123 = vmatpush1.msra.mxu0 0.0
    %124 = vmatprep.subr.mxu0 0.0
    %125 = vmatpush1.msra.mxu0 0.0
    %126 = vmatprep.subr.mxu0 0.0
    %127 = vmatpush1.msra.mxu0 0.0
    %128 = vmatprep.mubr.f32.mxu0 0.0
    %129 = vmatmul.mubr.f32.gmra.mrb[0].mxu0 %v55
    %v130 = vpop.f32.mrb[0].mxu0
    %v131 = vadd.f32 %v51, %v130
    %v132 = vpop.f32.mrb[0].mxu0
    %133 = vmatprep.mubr.f32.mxu0 0.0
    %134 = vmatmul.mubr.f32.gmra.mrb[0].mxu0 %v58
    %v135 = vpop.f32.mrb[0].mxu0
    %v136 = vadd.f32 %v51, %v135
    %v137 = vpop.f32.mrb[0].mxu0
    %138 = vdwg.mxu0
    %139 = vst [vmem:[#allocation2] sm:$0xff] %v131
    %140 = vst [vmem:[#allocation2 + $0x8] sm:$0xff] %v136
    %v141 = vld [vmem:[%s2] sm:$0xff]
    %v142 = vld [vmem:[%s2 + $0x8] sm:$0xff]
    %v143 = vld [vmem:[%s2 + $0x10] sm:$0xff]
    %v144 = vld [vmem:[%s2 + $0x18] sm:$0xff]
    %v145 = vld [vmem:[#allocation2] sm:$0x3]
    %vm146 = vcmask 261120
    %v148 = vsel %vm146, 0.0, 0
    %150 = vmatprep.subr.mxu0 0.0
    %151 = vmatpush1.msra.mxu0 %v141
    %152 = vmatprep.subr.mxu0 0.0
    %153 = vmatpush1.msra.mxu0 %v142
    %154 = vmatprep.subr.mxu0 0.0
    %155 = vmatpush1.msra.mxu0 %v143
    %156 = vmatprep.subr.mxu0 0.0
    %157 = vmatpush1.msra.mxu0 %v144
    %158 = vmatprep.subr.mxu0 0.0
    %159 = vmatpush1.msra.mxu0 0.0
    %160 = vmatprep.subr.mxu0 0.0
    %161 = vmatpush1.msra.mxu0 0.0
    %162 = vmatprep.subr.mxu0 0.0
    %163 = vmatpush1.msra.mxu0 0.0
    %164 = vmatprep.subr.mxu0 0.0
    %165 = vmatpush1.msra.mxu0 0.0
    %166 = vmatprep.subr.mxu0 0.0
    %167 = vmatpush1.msra.mxu0 0.0
    %168 = vmatprep.subr.mxu0 0.0
    %169 = vmatpush1.msra.mxu0 0.0
    %170 = vmatprep.subr.mxu0 0.0
    %171 = vmatpush1.msra.mxu0 0.0
    %172 = vmatprep.subr.mxu0 0.0
    %173 = vmatpush1.msra.mxu0 0.0
    %174 = vmatprep.subr.mxu0 0.0
    %175 = vmatpush1.msra.mxu0 0.0
    %176 = vmatprep.subr.mxu0 0.0
    %177 = vmatpush1.msra.mxu0 0.0
    %178 = vmatprep.subr.mxu0 0.0
    %179 = vmatpush1.msra.mxu0 0.0
    %180 = vmatprep.subr.mxu0 0.0
    %181 = vmatpush1.msra.mxu0 0.0
    %182 = vmatprep.subr.mxu0 0.0
    %183 = vmatpush1.msra.mxu0 0.0
    %184 = vmatprep.subr.mxu0 0.0
    %185 = vmatpush1.msra.mxu0 0.0
    %186 = vmatprep.subr.mxu0 0.0
    %187 = vmatpush1.msra.mxu0 0.0
    %188 = vmatprep.subr.mxu0 0.0
    %189 = vmatpush1.msra.mxu0 0.0
    %190 = vmatprep.subr.mxu0 0.0
    %191 = vmatpush1.msra.mxu0 0.0
    %192 = vmatprep.subr.mxu0 0.0
    %193 = vmatpush1.msra.mxu0 0.0
    %194 = vmatprep.subr.mxu0 0.0
    %195 = vmatpush1.msra.mxu0 0.0
    %196 = vmatprep.subr.mxu0 0.0
    %197 = vmatpush1.msra.mxu0 0.0
    %198 = vmatprep.subr.mxu0 0.0
    %199 = vmatpush1.msra.mxu0 0.0
    %200 = vmatprep.subr.mxu0 0.0
    %201 = vmatpush1.msra.mxu0 0.0
    %202 = vmatprep.subr.mxu0 0.0
    %203 = vmatpush1.msra.mxu0 0.0
    %204 = vmatprep.subr.mxu0 0.0
    %205 = vmatpush1.msra.mxu0 0.0
    %206 = vmatprep.subr.mxu0 0.0
    %207 = vmatpush1.msra.mxu0 0.0
    %208 = vmatprep.subr.mxu0 0.0
    %209 = vmatpush1.msra.mxu0 0.0
    %210 = vmatprep.subr.mxu0 0.0
    %211 = vmatpush1.msra.mxu0 0.0
    %212 = vmatprep.subr.mxu0 0.0
    %213 = vmatpush1.msra.mxu0 0.0
    %214 = vmatprep.mubr.f32.mxu0 0.0
    %215 = vmatmul.mubr.f32.gmra.mrb[0].mxu0 %v148
    %v216 = vpop.f32.mrb[0].mxu0
    %v217 = vadd.f32 0.0, %v216
    %v218 = vpop.f32.mrb[0].mxu0
    %219 = vdwg.mxu0
    %v220 = vadd.f32 %v145, %v217
    %v221 = vxor.u32 %v220, 2147483648
    %v222 = vmul.f32 %v221, 1.442695
    %v223 = vpow.pop %v222
    %v224 = vadd.f32 %v223, 1.0
    %v225 = vrcp.pop %v224
    %v226 = vmul.f32 1.0, %v225
    %v227 = vtanh.pop %v220
    %v228 = vmul.f32 %v226, 0.0
    %230 = vrot.lane.b32.xlu0 %v227, 64
    %v231 = vpop.permute.xlu0 %230
    %v233 = vmul.f32 %v226, %v231
    %235 = vrot.lane.b32.xlu0 %v233, 32
    %v236 = vpop.permute.xlu0 %235
    %v238 = vadd.f32 %v228, %v236
    %v239 = vtanh.pop %v238
    %241 = vrot.lane.b32.xlu0 %v239, 64
    %v242 = vpop.permute.xlu0 %241
    %v244 = vmul.f32 %v226, %v242
    %246 = vrot.lane.b32.xlu0 %v244, 32
    %v247 = vpop.permute.xlu0 %246
    %vm249 = vcmask 254976
    %250 = vst.msk [vmem:[#allocation3] sm:$0x3] %vm249, %v247
    %v251 = vld [vmem:[#allocation2 + $0x2] sm:$0x3]
    %v252 = vsel %vm146, %v247, 0
    %254 = vmatprep.subr.mxu0 0.0
    %255 = vmatpush1.msra.mxu0 %v141
    %256 = vmatprep.subr.mxu0 0.0
    %257 = vmatpush1.msra.mxu0 %v142
    %258 = vmatprep.subr.mxu0 0.0
    %259 = vmatpush1.msra.mxu0 %v143
    %260 = vmatprep.subr.mxu0 0.0
    %261 = vmatpush1.msra.mxu0 %v144
    %262 = vmatprep.subr.mxu0 0.0
    %263 = vmatpush1.msra.mxu0 0.0
    %264 = vmatprep.subr.mxu0 0.0
    %265 = vmatpush1.msra.mxu0 0.0
    %266 = vmatprep.subr.mxu0 0.0
    %267 = vmatpush1.msra.mxu0 0.0
    %268 = vmatprep.subr.mxu0 0.0
    %269 = vmatpush1.msra.mxu0 0.0
    %270 = vmatprep.subr.mxu0 0.0
    %271 = vmatpush1.msra.mxu0 0.0
    %272 = vmatprep.subr.mxu0 0.0
    %273 = vmatpush1.msra.mxu0 0.0
    %274 = vmatprep.subr.mxu0 0.0
    %275 = vmatpush1.msra.mxu0 0.0
    %276 = vmatprep.subr.mxu0 0.0
    %277 = vmatpush1.msra.mxu0 0.0
    %278 = vmatprep.subr.mxu0 0.0
    %279 = vmatpush1.msra.mxu0 0.0
    %280 = vmatprep.subr.mxu0 0.0
    %281 = vmatpush1.msra.mxu0 0.0
    %282 = vmatprep.subr.mxu0 0.0
    %283 = vmatpush1.msra.mxu0 0.0
    %284 = vmatprep.subr.mxu0 0.0
    %285 = vmatpush1.msra.mxu0 0.0
    %286 = vmatprep.subr.mxu0 0.0
    %287 = vmatpush1.msra.mxu0 0.0
    %288 = vmatprep.subr.mxu0 0.0
    %289 = vmatpush1.msra.mxu0 0.0
    %290 = vmatprep.subr.mxu0 0.0
    %291 = vmatpush1.msra.mxu0 0.0
    %292 = vmatprep.subr.mxu0 0.0
    %293 = vmatpush1.msra.mxu0 0.0
    %294 = vmatprep.subr.mxu0 0.0
    %295 = vmatpush1.msra.mxu0 0.0
    %296 = vmatprep.subr.mxu0 0.0
    %297 = vmatpush1.msra.mxu0 0.0
    %298 = vmatprep.subr.mxu0 0.0
    %299 = vmatpush1.msra.mxu0 0.0
    %300 = vmatprep.subr.mxu0 0.0
    %301 = vmatpush1.msra.mxu0 0.0
    %302 = vmatprep.subr.mxu0 0.0
    %303 = vmatpush1.msra.mxu0 0.0
    %304 = vmatprep.subr.mxu0 0.0
    %305 = vmatpush1.msra.mxu0 0.0
    %306 = vmatprep.subr.mxu0 0.0
    %307 = vmatpush1.msra.mxu0 0.0
    %308 = vmatprep.subr.mxu0 0.0
    %309 = vmatpush1.msra.mxu0 0.0
    %310 = vmatprep.subr.mxu0 0.0
    %311 = vmatpush1.msra.mxu0 0.0
    %312 = vmatprep.subr.mxu0 0.0
    %313 = vmatpush1.msra.mxu0 0.0
    %314 = vmatprep.subr.mxu0 0.0
    %315 = vmatpush1.msra.mxu0 0.0
    %316 = vmatprep.subr.mxu0 0.0
    %317 = vmatpush1.msra.mxu0 0.0
    %318 = vmatprep.mubr.f32.mxu0 0.0
    %319 = vmatmul.mubr.f32.gmra.mrb[0].mxu0 %v252
    %v320 = vpop.f32.mrb[0].mxu0
    %v321 = vadd.f32 0.0, %v320
    %v322 = vpop.f32.mrb[0].mxu0
    %323 = vdwg.mxu0
    %v324 = vadd.f32 %v251, %v321
    %v325 = vxor.u32 %v324, 2147483648
    %v326 = vmul.f32 %v325, 1.442695
    %v327 = vpow.pop %v326
    %v328 = vadd.f32 %v327, 1.0
    %v329 = vrcp.pop %v328
    %v330 = vmul.f32 1.0, %v329
    %v331 = vtanh.pop %v324
    %v332 = vmul.f32 %v330, %v238
    %334 = vrot.lane.b32.xlu0 %v331, 64
    %v335 = vpop.permute.xlu0 %334
    %v337 = vmul.f32 %v330, %v335
    %339 = vrot.lane.b32.xlu0 %v337, 32
    %v340 = vpop.permute.xlu0 %339
    %v342 = vadd.f32 %v332, %v340
    %v343 = vtanh.pop %v342
    %345 = vrot.lane.b32.xlu0 %v343, 64
    %v346 = vpop.permute.xlu0 %345
    %v348 = vmul.f32 %v330, %v346
    %350 = vrot.lane.b32.xlu0 %v348, 32
    %v351 = vpop.permute.xlu0 %350
    %353 = vst.msk [vmem:[#allocation3 + $0x2] sm:$0x3] %vm249, %v351
    %v354 = vld [vmem:[#allocation2 + $0x4] sm:$0x3]
    %v355 = vsel %vm146, %v351, 0
    %357 = vmatprep.subr.mxu0 0.0
    %358 = vmatpush1.msra.mxu0 %v141
    %359 = vmatprep.subr.mxu0 0.0
    %360 = vmatpush1.msra.mxu0 %v142
    %361 = vmatprep.subr.mxu0 0.0
    %362 = vmatpush1.msra.mxu0 %v143
    %363 = vmatprep.subr.mxu0 0.0
    %364 = vmatpush1.msra.mxu0 %v144
    %365 = vmatprep.subr.mxu0 0.0
    %366 = vmatpush1.msra.mxu0 0.0
    %367 = vmatprep.subr.mxu0 0.0
    %368 = vmatpush1.msra.mxu0 0.0
    %369 = vmatprep.subr.mxu0 0.0
    %370 = vmatpush1.msra.mxu0 0.0
    %371 = vmatprep.subr.mxu0 0.0
    %372 = vmatpush1.msra.mxu0 0.0
    %373 = vmatprep.subr.mxu0 0.0
    %374 = vmatpush1.msra.mxu0 0.0
    %375 = vmatprep.subr.mxu0 0.0
    %376 = vmatpush1.msra.mxu0 0.0
    %377 = vmatprep.subr.mxu0 0.0
    %378 = vmatpush1.msra.mxu0 0.0
    %379 = vmatprep.subr.mxu0 0.0
    %380 = vmatpush1.msra.mxu0 0.0
    %381 = vmatprep.subr.mxu0 0.0
    %382 = vmatpush1.msra.mxu0 0.0
    %383 = vmatprep.subr.mxu0 0.0
    %384 = vmatpush1.msra.mxu0 0.0
    %385 = vmatprep.subr.mxu0 0.0
    %386 = vmatpush1.msra.mxu0 0.0
    %387 = vmatprep.subr.mxu0 0.0
    %388 = vmatpush1.msra.mxu0 0.0
    %389 = vmatprep.subr.mxu0 0.0
    %390 = vmatpush1.msra.mxu0 0.0
    %391 = vmatprep.subr.mxu0 0.0
    %392 = vmatpush1.msra.mxu0 0.0
    %393 = vmatprep.subr.mxu0 0.0
    %394 = vmatpush1.msra.mxu0 0.0
    %395 = vmatprep.subr.mxu0 0.0
    %396 = vmatpush1.msra.mxu0 0.0
    %397 = vmatprep.subr.mxu0 0.0
    %398 = vmatpush1.msra.mxu0 0.0
    %399 = vmatprep.subr.mxu0 0.0
    %400 = vmatpush1.msra.mxu0 0.0
    %401 = vmatprep.subr.mxu0 0.0
    %402 = vmatpush1.msra.mxu0 0.0
    %403 = vmatprep.subr.mxu0 0.0
    %404 = vmatpush1.msra.mxu0 0.0
    %405 = vmatprep.subr.mxu0 0.0
    %406 = vmatpush1.msra.mxu0 0.0
    %407 = vmatprep.subr.mxu0 0.0
    %408 = vmatpush1.msra.mxu0 0.0
    %409 = vmatprep.subr.mxu0 0.0
    %410 = vmatpush1.msra.mxu0 0.0
    %411 = vmatprep.subr.mxu0 0.0
    %412 = vmatpush1.msra.mxu0 0.0
    %413 = vmatprep.subr.mxu0 0.0
    %414 = vmatpush1.msra.mxu0 0.0
    %415 = vmatprep.subr.mxu0 0.0
    %416 = vmatpush1.msra.mxu0 0.0
    %417 = vmatprep.subr.mxu0 0.0
    %418 = vmatpush1.msra.mxu0 0.0
    %419 = vmatprep.subr.mxu0 0.0
    %420 = vmatpush1.msra.mxu0 0.0
    %421 = vmatprep.mubr.f32.mxu0 0.0
    %422 = vmatmul.mubr.f32.gmra.mrb[0].mxu0 %v355
    %v423 = vpop.f32.mrb[0].mxu0
    %v424 = vadd.f32 0.0, %v423
    %v425 = vpop.f32.mrb[0].mxu0
    %426 = vdwg.mxu0
    %v427 = vadd.f32 %v354, %v424
    %v428 = vxor.u32 %v427, 2147483648
    %v429 = vmul.f32 %v428, 1.442695
    %v430 = vpow.pop %v429
    %v431 = vadd.f32 %v430, 1.0
    %v432 = vrcp.pop %v431
    %v433 = vmul.f32 1.0, %v432
    %v434 = vtanh.pop %v427
    %v435 = vmul.f32 %v433, %v342
    %437 = vrot.lane.b32.xlu0 %v434, 64
    %v438 = vpop.permute.xlu0 %437
    %v440 = vmul.f32 %v433, %v438
    %442 = vrot.lane.b32.xlu0 %v440, 32
    %v443 = vpop.permute.xlu0 %442
    %v445 = vadd.f32 %v435, %v443
    %v446 = vtanh.pop %v445
    %448 = vrot.lane.b32.xlu0 %v446, 64
    %v449 = vpop.permute.xlu0 %448
    %v451 = vmul.f32 %v433, %v449
    %453 = vrot.lane.b32.xlu0 %v451, 32
    %v454 = vpop.permute.xlu0 %453
    %456 = vst.msk [vmem:[#allocation3 + $0x4] sm:$0x3] %vm249, %v454
    %v457 = vld [vmem:[#allocation2 + $0x6] sm:$0x3]
    %v458 = vsel %vm146, %v454, 0
    %460 = vmatprep.subr.mxu0 0.0
    %461 = vmatpush1.msra.mxu0 %v141
    %462 = vmatprep.subr.mxu0 0.0
    %463 = vmatpush1.msra.mxu0 %v142
    %464 = vmatprep.subr.mxu0 0.0
    %465 = vmatpush1.msra.mxu0 %v143
    %466 = vmatprep.subr.mxu0 0.0
    %467 = vmatpush1.msra.mxu0 %v144
    %468 = vmatprep.subr.mxu0 0.0
    %469 = vmatpush1.msra.mxu0 0.0
    %470 = vmatprep.subr.mxu0 0.0
    %471 = vmatpush1.msra.mxu0 0.0
    %472 = vmatprep.subr.mxu0 0.0
    %473 = vmatpush1.msra.mxu0 0.0
    %474 = vmatprep.subr.mxu0 0.0
    %475 = vmatpush1.msra.mxu0 0.0
    %476 = vmatprep.subr.mxu0 0.0
    %477 = vmatpush1.msra.mxu0 0.0
    %478 = vmatprep.subr.mxu0 0.0
    %479 = vmatpush1.msra.mxu0 0.0
    %480 = vmatprep.subr.mxu0 0.0
    %481 = vmatpush1.msra.mxu0 0.0
    %482 = vmatprep.subr.mxu0 0.0
    %483 = vmatpush1.msra.mxu0 0.0
    %484 = vmatprep.subr.mxu0 0.0
    %485 = vmatpush1.msra.mxu0 0.0
    %486 = vmatprep.subr.mxu0 0.0
    %487 = vmatpush1.msra.mxu0 0.0
    %488 = vmatprep.subr.mxu0 0.0
    %489 = vmatpush1.msra.mxu0 0.0
    %490 = vmatprep.subr.mxu0 0.0
    %491 = vmatpush1.msra.mxu0 0.0
    %492 = vmatprep.subr.mxu0 0.0
    %493 = vmatpush1.msra.mxu0 0.0
    %494 = vmatprep.subr.mxu0 0.0
    %495 = vmatpush1.msra.mxu0 0.0
    %496 = vmatprep.subr.mxu0 0.0
    %497 = vmatpush1.msra.mxu0 0.0
    %498 = vmatprep.subr.mxu0 0.0
    %499 = vmatpush1.msra.mxu0 0.0
    %500 = vmatprep.subr.mxu0 0.0
    %501 = vmatpush1.msra.mxu0 0.0
    %502 = vmatprep.subr.mxu0 0.0
    %503 = vmatpush1.msra.mxu0 0.0
    %504 = vmatprep.subr.mxu0 0.0
    %505 = vmatpush1.msra.mxu0 0.0
    %506 = vmatprep.subr.mxu0 0.0
    %507 = vmatpush1.msra.mxu0 0.0
    %508 = vmatprep.subr.mxu0 0.0
    %509 = vmatpush1.msra.mxu0 0.0
    %510 = vmatprep.subr.mxu0 0.0
    %511 = vmatpush1.msra.mxu0 0.0
    %512 = vmatprep.subr.mxu0 0.0
    %513 = vmatpush1.msra.mxu0 0.0
    %514 = vmatprep.subr.mxu0 0.0
    %515 = vmatpush1.msra.mxu0 0.0
    %516 = vmatprep.subr.mxu0 0.0
    %517 = vmatpush1.msra.mxu0 0.0
    %518 = vmatprep.subr.mxu0 0.0
    %519 = vmatpush1.msra.mxu0 0.0
    %520 = vmatprep.subr.mxu0 0.0
    %521 = vmatpush1.msra.mxu0 0.0
    %522 = vmatprep.subr.mxu0 0.0
    %523 = vmatpush1.msra.mxu0 0.0
    %524 = vmatprep.mubr.f32.mxu0 0.0
    %525 = vmatmul.mubr.f32.gmra.mrb[0].mxu0 %v458
    %v526 = vpop.f32.mrb[0].mxu0
    %v527 = vadd.f32 0.0, %v526
    %v528 = vpop.f32.mrb[0].mxu0
    %529 = vdwg.mxu0
    %v530 = vadd.f32 %v457, %v527
    %v531 = vxor.u32 %v530, 2147483648
    %v532 = vmul.f32 %v531, 1.442695
    %v533 = vpow.pop %v532
    %v534 = vadd.f32 %v533, 1.0
    %v535 = vrcp.pop %v534
    %v536 = vmul.f32 1.0, %v535
    %v537 = vtanh.pop %v530
    %v538 = vmul.f32 %v536, %v445
    %540 = vrot.lane.b32.xlu0 %v537, 64
    %v541 = vpop.permute.xlu0 %540
    %v543 = vmul.f32 %v536, %v541
    %545 = vrot.lane.b32.xlu0 %v543, 32
    %v546 = vpop.permute.xlu0 %545
    %v548 = vadd.f32 %v538, %v546
    %v549 = vtanh.pop %v548
    %551 = vrot.lane.b32.xlu0 %v549, 64
    %v552 = vpop.permute.xlu0 %551
    %v554 = vmul.f32 %v536, %v552
    %556 = vrot.lane.b32.xlu0 %v554, 32
    %v557 = vpop.permute.xlu0 %556
    %559 = vst.msk [vmem:[#allocation3 + $0x6] sm:$0x3] %vm249, %v557
    %v560 = vld [vmem:[#allocation2 + $0x8] sm:$0x3]
    %v561 = vsel %vm146, %v557, 0
    %563 = vmatprep.subr.mxu0 0.0
    %564 = vmatpush1.msra.mxu0 %v141
    %565 = vmatprep.subr.mxu0 0.0
    %566 = vmatpush1.msra.mxu0 %v142
    %567 = vmatprep.subr.mxu0 0.0
    %568 = vmatpush1.msra.mxu0 %v143
    %569 = vmatprep.subr.mxu0 0.0
    %570 = vmatpush1.msra.mxu0 %v144
    %571 = vmatprep.subr.mxu0 0.0
    %572 = vmatpush1.msra.mxu0 0.0
    %573 = vmatprep.subr.mxu0 0.0
    %574 = vmatpush1.msra.mxu0 0.0
    %575 = vmatprep.subr.mxu0 0.0
    %576 = vmatpush1.msra.mxu0 0.0
    %577 = vmatprep.subr.mxu0 0.0
    %578 = vmatpush1.msra.mxu0 0.0
    %579 = vmatprep.subr.mxu0 0.0
    %580 = vmatpush1.msra.mxu0 0.0
    %581 = vmatprep.subr.mxu0 0.0
    %582 = vmatpush1.msra.mxu0 0.0
    %583 = vmatprep.subr.mxu0 0.0
    %584 = vmatpush1.msra.mxu0 0.0
    %585 = vmatprep.subr.mxu0 0.0
    %586 = vmatpush1.msra.mxu0 0.0
    %587 = vmatprep.subr.mxu0 0.0
    %588 = vmatpush1.msra.mxu0 0.0
    %589 = vmatprep.subr.mxu0 0.0
    %590 = vmatpush1.msra.mxu0 0.0
    %591 = vmatprep.subr.mxu0 0.0
    %592 = vmatpush1.msra.mxu0 0.0
    %593 = vmatprep.subr.mxu0 0.0
    %594 = vmatpush1.msra.mxu0 0.0
    %595 = vmatprep.subr.mxu0 0.0
    %596 = vmatpush1.msra.mxu0 0.0
    %597 = vmatprep.subr.mxu0 0.0
    %598 = vmatpush1.msra.mxu0 0.0
    %599 = vmatprep.subr.mxu0 0.0
    %600 = vmatpush1.msra.mxu0 0.0
    %601 = vmatprep.subr.mxu0 0.0
    %602 = vmatpush1.msra.mxu0 0.0
    %603 = vmatprep.subr.mxu0 0.0
    %604 = vmatpush1.msra.mxu0 0.0
    %605 = vmatprep.subr.mxu0 0.0
    %606 = vmatpush1.msra.mxu0 0.0
    %607 = vmatprep.subr.mxu0 0.0
    %608 = vmatpush1.msra.mxu0 0.0
    %609 = vmatprep.subr.mxu0 0.0
    %610 = vmatpush1.msra.mxu0 0.0
    %611 = vmatprep.subr.mxu0 0.0
    %612 = vmatpush1.msra.mxu0 0.0
    %613 = vmatprep.subr.mxu0 0.0
    %614 = vmatpush1.msra.mxu0 0.0
    %615 = vmatprep.subr.mxu0 0.0
    %616 = vmatpush1.msra.mxu0 0.0
    %617 = vmatprep.subr.mxu0 0.0
    %618 = vmatpush1.msra.mxu0 0.0
    %619 = vmatprep.subr.mxu0 0.0
    %620 = vmatpush1.msra.mxu0 0.0
    %621 = vmatprep.subr.mxu0 0.0
    %622 = vmatpush1.msra.mxu0 0.0
    %623 = vmatprep.subr.mxu0 0.0
    %624 = vmatpush1.msra.mxu0 0.0
    %625 = vmatprep.subr.mxu0 0.0
    %626 = vmatpush1.msra.mxu0 0.0
    %627 = vmatprep.mubr.f32.mxu0 0.0
    %628 = vmatmul.mubr.f32.gmra.mrb[0].mxu0 %v561
    %v629 = vpop.f32.mrb[0].mxu0
    %v630 = vadd.f32 0.0, %v629
    %v631 = vpop.f32.mrb[0].mxu0
    %632 = vdwg.mxu0
    %v633 = vadd.f32 %v560, %v630
    %v634 = vxor.u32 %v633, 2147483648
    %v635 = vmul.f32 %v634, 1.442695
    %v636 = vpow.pop %v635
    %v637 = vadd.f32 %v636, 1.0
    %v638 = vrcp.pop %v637
    %v639 = vmul.f32 1.0, %v638
    %v640 = vtanh.pop %v633
    %v641 = vmul.f32 %v639, %v548
    %643 = vrot.lane.b32.xlu0 %v640, 64
    %v644 = vpop.permute.xlu0 %643
    %v646 = vmul.f32 %v639, %v644
    %648 = vrot.lane.b32.xlu0 %v646, 32
    %v649 = vpop.permute.xlu0 %648
    %v651 = vadd.f32 %v641, %v649
    %v652 = vtanh.pop %v651
    %654 = vrot.lane.b32.xlu0 %v652, 64
    %v655 = vpop.permute.xlu0 %654
    %v657 = vmul.f32 %v639, %v655
    %659 = vrot.lane.b32.xlu0 %v657, 32
    %v660 = vpop.permute.xlu0 %659
    %662 = vst.msk [vmem:[#allocation3 + $0x8] sm:$0x3] %vm249, %v660
    %v663 = vld [vmem:[#allocation2 + $0xa] sm:$0x3]
    %v664 = vsel %vm146, %v660, 0
    %666 = vmatprep.subr.mxu0 0.0
    %667 = vmatpush1.msra.mxu0 %v141
    %668 = vmatprep.subr.mxu0 0.0
    %669 = vmatpush1.msra.mxu0 %v142
    %670 = vmatprep.subr.mxu0 0.0
    %671 = vmatpush1.msra.mxu0 %v143
    %672 = vmatprep.subr.mxu0 0.0
    %673 = vmatpush1.msra.mxu0 %v144
    %674 = vmatprep.subr.mxu0 0.0
    %675 = vmatpush1.msra.mxu0 0.0
    %676 = vmatprep.subr.mxu0 0.0
    %677 = vmatpush1.msra.mxu0 0.0
    %678 = vmatprep.subr.mxu0 0.0
    %679 = vmatpush1.msra.mxu0 0.0
    %680 = vmatprep.subr.mxu0 0.0
    %681 = vmatpush1.msra.mxu0 0.0
    %682 = vmatprep.subr.mxu0 0.0
    %683 = vmatpush1.msra.mxu0 0.0
    %684 = vmatprep.subr.mxu0 0.0
    %685 = vmatpush1.msra.mxu0 0.0
    %686 = vmatprep.subr.mxu0 0.0
    %687 = vmatpush1.msra.mxu0 0.0
    %688 = vmatprep.subr.mxu0 0.0
    %689 = vmatpush1.msra.mxu0 0.0
    %690 = vmatprep.subr.mxu0 0.0
    %691 = vmatpush1.msra.mxu0 0.0
    %692 = vmatprep.subr.mxu0 0.0
    %693 = vmatpush1.msra.mxu0 0.0
    %694 = vmatprep.subr.mxu0 0.0
    %695 = vmatpush1.msra.mxu0 0.0
    %696 = vmatprep.subr.mxu0 0.0
    %697 = vmatpush1.msra.mxu0 0.0
    %698 = vmatprep.subr.mxu0 0.0
    %699 = vmatpush1.msra.mxu0 0.0
    %700 = vmatprep.subr.mxu0 0.0
    %701 = vmatpush1.msra.mxu0 0.0
    %702 = vmatprep.subr.mxu0 0.0
    %703 = vmatpush1.msra.mxu0 0.0
    %704 = vmatprep.subr.mxu0 0.0
    %705 = vmatpush1.msra.mxu0 0.0
    %706 = vmatprep.subr.mxu0 0.0
    %707 = vmatpush1.msra.mxu0 0.0
    %708 = vmatprep.subr.mxu0 0.0
    %709 = vmatpush1.msra.mxu0 0.0
    %710 = vmatprep.subr.mxu0 0.0
    %711 = vmatpush1.msra.mxu0 0.0
    %712 = vmatprep.subr.mxu0 0.0
    %713 = vmatpush1.msra.mxu0 0.0
    %714 = vmatprep.subr.mxu0 0.0
    %715 = vmatpush1.msra.mxu0 0.0
    %716 = vmatprep.subr.mxu0 0.0
    %717 = vmatpush1.msra.mxu0 0.0
    %718 = vmatprep.subr.mxu0 0.0
    %719 = vmatpush1.msra.mxu0 0.0
    %720 = vmatprep.subr.mxu0 0.0
    %721 = vmatpush1.msra.mxu0 0.0
    %722 = vmatprep.subr.mxu0 0.0
    %723 = vmatpush1.msra.mxu0 0.0
    %724 = vmatprep.subr.mxu0 0.0
    %725 = vmatpush1.msra.mxu0 0.0
    %726 = vmatprep.subr.mxu0 0.0
    %727 = vmatpush1.msra.mxu0 0.0
    %728 = vmatprep.subr.mxu0 0.0
    %729 = vmatpush1.msra.mxu0 0.0
    %730 = vmatprep.mubr.f32.mxu0 0.0
    %731 = vmatmul.mubr.f32.gmra.mrb[0].mxu0 %v664
    %v732 = vpop.f32.mrb[0].mxu0
    %v733 = vadd.f32 0.0, %v732
    %v734 = vpop.f32.mrb[0].mxu0
    %735 = vdwg.mxu0
    %v736 = vadd.f32 %v663, %v733
    %v737 = vxor.u32 %v736, 2147483648
    %v738 = vmul.f32 %v737, 1.442695
    %v739 = vpow.pop %v738
    %v740 = vadd.f32 %v739, 1.0
    %v741 = vrcp.pop %v740
    %v742 = vmul.f32 1.0, %v741
    %v743 = vtanh.pop %v736
    %v744 = vmul.f32 %v742, %v651
    %746 = vrot.lane.b32.xlu0 %v743, 64
    %v747 = vpop.permute.xlu0 %746
    %v749 = vmul.f32 %v742, %v747
    %751 = vrot.lane.b32.xlu0 %v749, 32
    %v752 = vpop.permute.xlu0 %751
    %v754 = vadd.f32 %v744, %v752
    %v755 = vtanh.pop %v754
    %757 = vrot.lane.b32.xlu0 %v755, 64
    %v758 = vpop.permute.xlu0 %757
    %v760 = vmul.f32 %v742, %v758
    %762 = vrot.lane.b32.xlu0 %v760, 32
    %v763 = vpop.permute.xlu0 %762
    %765 = vst.msk [vmem:[#allocation3 + $0xa] sm:$0x3] %vm249, %v763
    %v766 = vld [vmem:[#allocation2 + $0xc] sm:$0x3]
    %v767 = vsel %vm146, %v763, 0
    %769 = vmatprep.subr.mxu0 0.0
    %770 = vmatpush1.msra.mxu0 %v141
    %771 = vmatprep.subr.mxu0 0.0
    %772 = vmatpush1.msra.mxu0 %v142
    %773 = vmatprep.subr.mxu0 0.0
    %774 = vmatpush1.msra.mxu0 %v143
    %775 = vmatprep.subr.mxu0 0.0
    %776 = vmatpush1.msra.mxu0 %v144
    %777 = vmatprep.subr.mxu0 0.0
    %778 = vmatpush1.msra.mxu0 0.0
    %779 = vmatprep.subr.mxu0 0.0
    %780 = vmatpush1.msra.mxu0 0.0
    %781 = vmatprep.subr.mxu0 0.0
    %782 = vmatpush1.msra.mxu0 0.0
    %783 = vmatprep.subr.mxu0 0.0
    %784 = vmatpush1.msra.mxu0 0.0
    %785 = vmatprep.subr.mxu0 0.0
    %786 = vmatpush1.msra.mxu0 0.0
    %787 = vmatprep.subr.mxu0 0.0
    %788 = vmatpush1.msra.mxu0 0.0
    %789 = vmatprep.subr.mxu0 0.0
    %790 = vmatpush1.msra.mxu0 0.0
    %791 = vmatprep.subr.mxu0 0.0
    %792 = vmatpush1.msra.mxu0 0.0
    %793 = vmatprep.subr.mxu0 0.0
    %794 = vmatpush1.msra.mxu0 0.0
    %795 = vmatprep.subr.mxu0 0.0
    %796 = vmatpush1.msra.mxu0 0.0
    %797 = vmatprep.subr.mxu0 0.0
    %798 = vmatpush1.msra.mxu0 0.0
    %799 = vmatprep.subr.mxu0 0.0
    %800 = vmatpush1.msra.mxu0 0.0
    %801 = vmatprep.subr.mxu0 0.0
    %802 = vmatpush1.msra.mxu0 0.0
    %803 = vmatprep.subr.mxu0 0.0
    %804 = vmatpush1.msra.mxu0 0.0
    %805 = vmatprep.subr.mxu0 0.0
    %806 = vmatpush1.msra.mxu0 0.0
    %807 = vmatprep.subr.mxu0 0.0
    %808 = vmatpush1.msra.mxu0 0.0
    %809 = vmatprep.subr.mxu0 0.0
    %810 = vmatpush1.msra.mxu0 0.0
    %811 = vmatprep.subr.mxu0 0.0
    %812 = vmatpush1.msra.mxu0 0.0
    %813 = vmatprep.subr.mxu0 0.0
    %814 = vmatpush1.msra.mxu0 0.0
    %815 = vmatprep.subr.mxu0 0.0
    %816 = vmatpush1.msra.mxu0 0.0
    %817 = vmatprep.subr.mxu0 0.0
    %818 = vmatpush1.msra.mxu0 0.0
    %819 = vmatprep.subr.mxu0 0.0
    %820 = vmatpush1.msra.mxu0 0.0
    %821 = vmatprep.subr.mxu0 0.0
    %822 = vmatpush1.msra.mxu0 0.0
    %823 = vmatprep.subr.mxu0 0.0
    %824 = vmatpush1.msra.mxu0 0.0
    %825 = vmatprep.subr.mxu0 0.0
    %826 = vmatpush1.msra.mxu0 0.0
    %827 = vmatprep.subr.mxu0 0.0
    %828 = vmatpush1.msra.mxu0 0.0
    %829 = vmatprep.subr.mxu0 0.0
    %830 = vmatpush1.msra.mxu0 0.0
    %831 = vmatprep.subr.mxu0 0.0
    %832 = vmatpush1.msra.mxu0 0.0
    %833 = vmatprep.mubr.f32.mxu0 0.0
    %834 = vmatmul.mubr.f32.gmra.mrb[0].mxu0 %v767
    %v835 = vpop.f32.mrb[0].mxu0
    %v836 = vadd.f32 0.0, %v835
    %v837 = vpop.f32.mrb[0].mxu0
    %838 = vdwg.mxu0
    %v839 = vadd.f32 %v766, %v836
    %v840 = vxor.u32 %v839, 2147483648
    %v841 = vmul.f32 %v840, 1.442695
    %v842 = vpow.pop %v841
    %v843 = vadd.f32 %v842, 1.0
    %v844 = vrcp.pop %v843
    %v845 = vmul.f32 1.0, %v844
    %v846 = vtanh.pop %v839
    %v847 = vmul.f32 %v845, %v754
    %849 = vrot.lane.b32.xlu0 %v846, 64
    %v850 = vpop.permute.xlu0 %849
    %v852 = vmul.f32 %v845, %v850
    %854 = vrot.lane.b32.xlu0 %v852, 32
    %v855 = vpop.permute.xlu0 %854
    %v857 = vadd.f32 %v847, %v855
    %v858 = vtanh.pop %v857
    %860 = vrot.lane.b32.xlu0 %v858, 64
    %v861 = vpop.permute.xlu0 %860
    %v863 = vmul.f32 %v845, %v861
    %865 = vrot.lane.b32.xlu0 %v863, 32
    %v866 = vpop.permute.xlu0 %865
    %868 = vst.msk [vmem:[#allocation3 + $0xc] sm:$0x3] %vm249, %v866
    %v869 = vld [vmem:[#allocation2 + $0xe] sm:$0x3]
    %v870 = vsel %vm146, %v866, 0
    %872 = vmatprep.subr.mxu0 0.0
    %873 = vmatpush1.msra.mxu0 %v141
    %874 = vmatprep.subr.mxu0 0.0
    %875 = vmatpush1.msra.mxu0 %v142
    %876 = vmatprep.subr.mxu0 0.0
    %877 = vmatpush1.msra.mxu0 %v143
    %878 = vmatprep.subr.mxu0 0.0
    %879 = vmatpush1.msra.mxu0 %v144
    %880 = vmatprep.subr.mxu0 0.0
    %881 = vmatpush1.msra.mxu0 0.0
    %882 = vmatprep.subr.mxu0 0.0
    %883 = vmatpush1.msra.mxu0 0.0
    %884 = vmatprep.subr.mxu0 0.0
    %885 = vmatpush1.msra.mxu0 0.0
    %886 = vmatprep.subr.mxu0 0.0
    %887 = vmatpush1.msra.mxu0 0.0
    %888 = vmatprep.subr.mxu0 0.0
    %889 = vmatpush1.msra.mxu0 0.0
    %890 = vmatprep.subr.mxu0 0.0
    %891 = vmatpush1.msra.mxu0 0.0
    %892 = vmatprep.subr.mxu0 0.0
    %893 = vmatpush1.msra.mxu0 0.0
    %894 = vmatprep.subr.mxu0 0.0
    %895 = vmatpush1.msra.mxu0 0.0
    %896 = vmatprep.subr.mxu0 0.0
    %897 = vmatpush1.msra.mxu0 0.0
    %898 = vmatprep.subr.mxu0 0.0
    %899 = vmatpush1.msra.mxu0 0.0
    %900 = vmatprep.subr.mxu0 0.0
    %901 = vmatpush1.msra.mxu0 0.0
    %902 = vmatprep.subr.mxu0 0.0
    %903 = vmatpush1.msra.mxu0 0.0
    %904 = vmatprep.subr.mxu0 0.0
    %905 = vmatpush1.msra.mxu0 0.0
    %906 = vmatprep.subr.mxu0 0.0
    %907 = vmatpush1.msra.mxu0 0.0
    %908 = vmatprep.subr.mxu0 0.0
    %909 = vmatpush1.msra.mxu0 0.0
    %910 = vmatprep.subr.mxu0 0.0
    %911 = vmatpush1.msra.mxu0 0.0
    %912 = vmatprep.subr.mxu0 0.0
    %913 = vmatpush1.msra.mxu0 0.0
    %914 = vmatprep.subr.mxu0 0.0
    %915 = vmatpush1.msra.mxu0 0.0
    %916 = vmatprep.subr.mxu0 0.0
    %917 = vmatpush1.msra.mxu0 0.0
    %918 = vmatprep.subr.mxu0 0.0
    %919 = vmatpush1.msra.mxu0 0.0
    %920 = vmatprep.subr.mxu0 0.0
    %921 = vmatpush1.msra.mxu0 0.0
    %922 = vmatprep.subr.mxu0 0.0
    %923 = vmatpush1.msra.mxu0 0.0
    %924 = vmatprep.subr.mxu0 0.0
    %925 = vmatpush1.msra.mxu0 0.0
    %926 = vmatprep.subr.mxu0 0.0
    %927 = vmatpush1.msra.mxu0 0.0
    %928 = vmatprep.subr.mxu0 0.0
    %929 = vmatpush1.msra.mxu0 0.0
    %930 = vmatprep.subr.mxu0 0.0
    %931 = vmatpush1.msra.mxu0 0.0
    %932 = vmatprep.subr.mxu0 0.0
    %933 = vmatpush1.msra.mxu0 0.0
    %934 = vmatprep.subr.mxu0 0.0
    %935 = vmatpush1.msra.mxu0 0.0
    %936 = vmatprep.mubr.f32.mxu0 0.0
    %937 = vmatmul.mubr.f32.gmra.mrb[0].mxu0 %v870
    %v938 = vpop.f32.mrb[0].mxu0
    %v939 = vadd.f32 0.0, %v938
    %v940 = vpop.f32.mrb[0].mxu0
    %941 = vdwg.mxu0
    %v942 = vadd.f32 %v869, %v939
    %v943 = vxor.u32 %v942, 2147483648
    %v944 = vmul.f32 %v943, 1.442695
    %v945 = vpow.pop %v944
    %v946 = vadd.f32 %v945, 1.0
    %v947 = vrcp.pop %v946
    %v948 = vmul.f32 1.0, %v947
    %v949 = vtanh.pop %v942
    %v950 = vmul.f32 %v948, %v857
    %952 = vrot.lane.b32.xlu0 %v949, 64
    %v953 = vpop.permute.xlu0 %952
    %v955 = vmul.f32 %v948, %v953
    %957 = vrot.lane.b32.xlu0 %v955, 32
    %v958 = vpop.permute.xlu0 %957
    %v960 = vadd.f32 %v950, %v958
    %v961 = vtanh.pop %v960
    %963 = vrot.lane.b32.xlu0 %v961, 64
    %v964 = vpop.permute.xlu0 %963
    %v966 = vmul.f32 %v948, %v964
    %968 = vrot.lane.b32.xlu0 %v966, 32
    %v969 = vpop.permute.xlu0 %968
    %971 = vst.msk [vmem:[#allocation3 + $0xe] sm:$0x3] %vm249, %v969
    %972 = vst.msk [vmem:[#allocation6] sm:$0x3] %vm249, %v969
    %974 = vrot.lane.b32.xlu0 %v960, 96
    %v975 = vpop.permute.xlu0 %974
    %977 = vst.msk [vmem:[#allocation8] sm:$0x3] %vm249, %v975
    %v978 = vld [vmem:[#allocation3] sm:$0xff]
    %v979 = vld [vmem:[#allocation3 + $0x8] sm:$0xff]
    %v980 = vld [vmem:[%s4] sm:$0xff]
    %v981 = vld [vmem:[%s4 + $0x8] sm:$0xff]
    %v982 = vld [vmem:[%s4 + $0x10] sm:$0xff]
    %v983 = vld [vmem:[%s4 + $0x18] sm:$0xff]
    %v984 = vld [vmem:[%s6] sm:$0x1]
    %v986 = vlaneseq
    %v987 = vshrl.u32 %v986, 7
    %v988 = vsub.s32 0, %v987
    %v989 = vrot.slane %v984, %v988
    %v992 = vsel %vm146, %v978, 0
    %v995 = vsel %vm146, %v979, 0
    %997 = vmatprep.subr.mxu0 0.0
    %998 = vmatpush1.msra.mxu0 %v980
    %999 = vmatprep.subr.mxu0 0.0
    %1000 = vmatpush1.msra.mxu0 %v981
    %1001 = vmatprep.subr.mxu0 0.0
    %1002 = vmatpush1.msra.mxu0 %v982
    %1003 = vmatprep.subr.mxu0 0.0
    %1004 = vmatpush1.msra.mxu0 %v983
    %1005 = vmatprep.subr.mxu0 0.0
    %1006 = vmatpush1.msra.mxu0 0.0
    %1007 = vmatprep.subr.mxu0 0.0
    %1008 = vmatpush1.msra.mxu0 0.0
    %1009 = vmatprep.subr.mxu0 0.0
    %1010 = vmatpush1.msra.mxu0 0.0
    %1011 = vmatprep.subr.mxu0 0.0
    %1012 = vmatpush1.msra.mxu0 0.0
    %1013 = vmatprep.subr.mxu0 0.0
    %1014 = vmatpush1.msra.mxu0 0.0
    %1015 = vmatprep.subr.mxu0 0.0
    %1016 = vmatpush1.msra.mxu0 0.0
    %1017 = vmatprep.subr.mxu0 0.0
    %1018 = vmatpush1.msra.mxu0 0.0
    %1019 = vmatprep.subr.mxu0 0.0
    %1020 = vmatpush1.msra.mxu0 0.0
    %1021 = vmatprep.subr.mxu0 0.0
    %1022 = vmatpush1.msra.mxu0 0.0
    %1023 = vmatprep.subr.mxu0 0.0
    %1024 = vmatpush1.msra.mxu0 0.0
    %1025 = vmatprep.subr.mxu0 0.0
    %1026 = vmatpush1.msra.mxu0 0.0
    %1027 = vmatprep.subr.mxu0 0.0
    %1028 = vmatpush1.msra.mxu0 0.0
    %1029 = vmatprep.subr.mxu0 0.0
    %1030 = vmatpush1.msra.mxu0 0.0
    %1031 = vmatprep.subr.mxu0 0.0
    %1032 = vmatpush1.msra.mxu0 0.0
    %1033 = vmatprep.subr.mxu0 0.0
    %1034 = vmatpush1.msra.mxu0 0.0
    %1035 = vmatprep.subr.mxu0 0.0
    %1036 = vmatpush1.msra.mxu0 0.0
    %1037 = vmatprep.subr.mxu0 0.0
    %1038 = vmatpush1.msra.mxu0 0.0
    %1039 = vmatprep.subr.mxu0 0.0
    %1040 = vmatpush1.msra.mxu0 0.0
    %1041 = vmatprep.subr.mxu0 0.0
    %1042 = vmatpush1.msra.mxu0 0.0
    %1043 = vmatprep.subr.mxu0 0.0
    %1044 = vmatpush1.msra.mxu0 0.0
    %1045 = vmatprep.subr.mxu0 0.0
    %1046 = vmatpush1.msra.mxu0 0.0
    %1047 = vmatprep.subr.mxu0 0.0
    %1048 = vmatpush1.msra.mxu0 0.0
    %1049 = vmatprep.subr.mxu0 0.0
    %1050 = vmatpush1.msra.mxu0 0.0
    %1051 = vmatprep.subr.mxu0 0.0
    %1052 = vmatpush1.msra.mxu0 0.0
    %1053 = vmatprep.subr.mxu0 0.0
    %1054 = vmatpush1.msra.mxu0 0.0
    %1055 = vmatprep.subr.mxu0 0.0
    %1056 = vmatpush1.msra.mxu0 0.0
    %1057 = vmatprep.subr.mxu0 0.0
    %1058 = vmatpush1.msra.mxu0 0.0
    %1059 = vmatprep.subr.mxu0 0.0
    %1060 = vmatpush1.msra.mxu0 0.0
    %1061 = vmatprep.mubr.f32.mxu0 0.0
    %1062 = vmatmul.mubr.f32.gmra.mrb[0].mxu0 %v992
    %v1063 = vpop.f32.mrb[0].mxu0
    %v1064 = vadd.f32 %v989, %v1063
    %v1065 = vpop.f32.mrb[0].mxu0
    %1066 = vmatprep.mubr.f32.mxu0 0.0
    %1067 = vmatmul.mubr.f32.gmra.mrb[0].mxu0 %v995
    %v1068 = vpop.f32.mrb[0].mxu0
    %v1069 = vadd.f32 %v989, %v1068
    %v1070 = vpop.f32.mrb[0].mxu0
    %1071 = vdwg.mxu0
    %1072 = vst [vmem:[#allocation2] sm:$0xff] %v1064
    %1073 = vst [vmem:[#allocation2 + $0x8] sm:$0xff] %v1069
    %v1074 = vld [vmem:[%s5] sm:$0xff]
    %v1075 = vld [vmem:[%s5 + $0x8] sm:$0xff]
    %v1076 = vld [vmem:[%s5 + $0x10] sm:$0xff]
    %v1077 = vld [vmem:[%s5 + $0x18] sm:$0xff]
    %v1078 = vld [vmem:[#allocation2] sm:$0x3]
    %1079 = vmatprep.subr.mxu0 0.0
    %1080 = vmatpush1.msra.mxu0 %v1074
    %1081 = vmatprep.subr.mxu0 0.0
    %1082 = vmatpush1.msra.mxu0 %v1075
    %1083 = vmatprep.subr.mxu0 0.0
    %1084 = vmatpush1.msra.mxu0 %v1076
    %1085 = vmatprep.subr.mxu0 0.0
    %1086 = vmatpush1.msra.mxu0 %v1077
    %1087 = vmatprep.subr.mxu0 0.0
    %1088 = vmatpush1.msra.mxu0 0.0
    %1089 = vmatprep.subr.mxu0 0.0
    %1090 = vmatpush1.msra.mxu0 0.0
    %1091 = vmatprep.subr.mxu0 0.0
    %1092 = vmatpush1.msra.mxu0 0.0
    %1093 = vmatprep.subr.mxu0 0.0
    %1094 = vmatpush1.msra.mxu0 0.0
    %1095 = vmatprep.subr.mxu0 0.0
    %1096 = vmatpush1.msra.mxu0 0.0
    %1097 = vmatprep.subr.mxu0 0.0
    %1098 = vmatpush1.msra.mxu0 0.0
    %1099 = vmatprep.subr.mxu0 0.0
    %1100 = vmatpush1.msra.mxu0 0.0
    %1101 = vmatprep.subr.mxu0 0.0
    %1102 = vmatpush1.msra.mxu0 0.0
    %1103 = vmatprep.subr.mxu0 0.0
    %1104 = vmatpush1.msra.mxu0 0.0
    %1105 = vmatprep.subr.mxu0 0.0
    %1106 = vmatpush1.msra.mxu0 0.0
    %1107 = vmatprep.subr.mxu0 0.0
    %1108 = vmatpush1.msra.mxu0 0.0
    %1109 = vmatprep.subr.mxu0 0.0
    %1110 = vmatpush1.msra.mxu0 0.0
    %1111 = vmatprep.subr.mxu0 0.0
    %1112 = vmatpush1.msra.mxu0 0.0
    %1113 = vmatprep.subr.mxu0 0.0
    %1114 = vmatpush1.msra.mxu0 0.0
    %1115 = vmatprep.subr.mxu0 0.0
    %1116 = vmatpush1.msra.mxu0 0.0
    %1117 = vmatprep.subr.mxu0 0.0
    %1118 = vmatpush1.msra.mxu0 0.0
    %1119 = vmatprep.subr.mxu0 0.0
    %1120 = vmatpush1.msra.mxu0 0.0
    %1121 = vmatprep.subr.mxu0 0.0
    %1122 = vmatpush1.msra.mxu0 0.0
    %1123 = vmatprep.subr.mxu0 0.0
    %1124 = vmatpush1.msra.mxu0 0.0
    %1125 = vmatprep.subr.mxu0 0.0
    %1126 = vmatpush1.msra.mxu0 0.0
    %1127 = vmatprep.subr.mxu0 0.0
    %1128 = vmatpush1.msra.mxu0 0.0
    %1129 = vmatprep.subr.mxu0 0.0
    %1130 = vmatpush1.msra.mxu0 0.0
    %1131 = vmatprep.subr.mxu0 0.0
    %1132 = vmatpush1.msra.mxu0 0.0
    %1133 = vmatprep.subr.mxu0 0.0
    %1134 = vmatpush1.msra.mxu0 0.0
    %1135 = vmatprep.subr.mxu0 0.0
    %1136 = vmatpush1.msra.mxu0 0.0
    %1137 = vmatprep.subr.mxu0 0.0
    %1138 = vmatpush1.msra.mxu0 0.0
    %1139 = vmatprep.subr.mxu0 0.0
    %1140 = vmatpush1.msra.mxu0 0.0
    %1141 = vmatprep.subr.mxu0 0.0
    %1142 = vmatpush1.msra.mxu0 0.0
    %1143 = vmatprep.mubr.f32.mxu0 0.0
    %1144 = vmatmul.mubr.f32.gmra.mrb[0].mxu0 %v148
    %v1145 = vpop.f32.mrb[0].mxu0
    %v1146 = vadd.f32 0.0, %v1145
    %v1147 = vpop.f32.mrb[0].mxu0
    %1148 = vdwg.mxu0
    %v1149 = vadd.f32 %v1078, %v1146
    %v1150 = vxor.u32 %v1149, 2147483648
    %v1151 = vmul.f32 %v1150, 1.442695
    %v1152 = vpow.pop %v1151
    %v1153 = vadd.f32 %v1152, 1.0
    %v1154 = vrcp.pop %v1153
    %v1155 = vmul.f32 1.0, %v1154
    %v1156 = vtanh.pop %v1149
    %v1157 = vmul.f32 %v1155, 0.0
    %1159 = vrot.lane.b32.xlu0 %v1156, 64
    %v1160 = vpop.permute.xlu0 %1159
    %v1162 = vmul.f32 %v1155, %v1160
    %1164 = vrot.lane.b32.xlu0 %v1162, 32
    %v1165 = vpop.permute.xlu0 %1164
    %v1167 = vadd.f32 %v1157, %v1165
    %v1168 = vtanh.pop %v1167
    %1170 = vrot.lane.b32.xlu0 %v1168, 64
    %v1171 = vpop.permute.xlu0 %1170
    %v1173 = vmul.f32 %v1155, %v1171
    %v1174 = vld [vmem:[#allocation2 + $0x2] sm:$0x3]
    %1176 = vrot.lane.b32.xlu0 %v1173, 32
    %v1177 = vpop.permute.xlu0 %1176
    %v1178 = vsel %vm146, %v1177, 0
    %1180 = vmatprep.subr.mxu0 0.0
    %1181 = vmatpush1.msra.mxu0 %v1074
    %1182 = vmatprep.subr.mxu0 0.0
    %1183 = vmatpush1.msra.mxu0 %v1075
    %1184 = vmatprep.subr.mxu0 0.0
    %1185 = vmatpush1.msra.mxu0 %v1076
    %1186 = vmatprep.subr.mxu0 0.0
    %1187 = vmatpush1.msra.mxu0 %v1077
    %1188 = vmatprep.subr.mxu0 0.0
    %1189 = vmatpush1.msra.mxu0 0.0
    %1190 = vmatprep.subr.mxu0 0.0
    %1191 = vmatpush1.msra.mxu0 0.0
    %1192 = vmatprep.subr.mxu0 0.0
    %1193 = vmatpush1.msra.mxu0 0.0
    %1194 = vmatprep.subr.mxu0 0.0
    %1195 = vmatpush1.msra.mxu0 0.0
    %1196 = vmatprep.subr.mxu0 0.0
    %1197 = vmatpush1.msra.mxu0 0.0
    %1198 = vmatprep.subr.mxu0 0.0
    %1199 = vmatpush1.msra.mxu0 0.0
    %1200 = vmatprep.subr.mxu0 0.0
    %1201 = vmatpush1.msra.mxu0 0.0
    %1202 = vmatprep.subr.mxu0 0.0
    %1203 = vmatpush1.msra.mxu0 0.0
    %1204 = vmatprep.subr.mxu0 0.0
    %1205 = vmatpush1.msra.mxu0 0.0
    %1206 = vmatprep.subr.mxu0 0.0
    %1207 = vmatpush1.msra.mxu0 0.0
    %1208 = vmatprep.subr.mxu0 0.0
    %1209 = vmatpush1.msra.mxu0 0.0
    %1210 = vmatprep.subr.mxu0 0.0
    %1211 = vmatpush1.msra.mxu0 0.0
    %1212 = vmatprep.subr.mxu0 0.0
    %1213 = vmatpush1.msra.mxu0 0.0
    %1214 = vmatprep.subr.mxu0 0.0
    %1215 = vmatpush1.msra.mxu0 0.0
    %1216 = vmatprep.subr.mxu0 0.0
    %1217 = vmatpush1.msra.mxu0 0.0
    %1218 = vmatprep.subr.mxu0 0.0
    %1219 = vmatpush1.msra.mxu0 0.0
    %1220 = vmatprep.subr.mxu0 0.0
    %1221 = vmatpush1.msra.mxu0 0.0
    %1222 = vmatprep.subr.mxu0 0.0
    %1223 = vmatpush1.msra.mxu0 0.0
    %1224 = vmatprep.subr.mxu0 0.0
    %1225 = vmatpush1.msra.mxu0 0.0
    %1226 = vmatprep.subr.mxu0 0.0
    %1227 = vmatpush1.msra.mxu0 0.0
    %1228 = vmatprep.subr.mxu0 0.0
    %1229 = vmatpush1.msra.mxu0 0.0
    %1230 = vmatprep.subr.mxu0 0.0
    %1231 = vmatpush1.msra.mxu0 0.0
    %1232 = vmatprep.subr.mxu0 0.0
    %1233 = vmatpush1.msra.mxu0 0.0
    %1234 = vmatprep.subr.mxu0 0.0
    %1235 = vmatpush1.msra.mxu0 0.0
    %1236 = vmatprep.subr.mxu0 0.0
    %1237 = vmatpush1.msra.mxu0 0.0
    %1238 = vmatprep.subr.mxu0 0.0
    %1239 = vmatpush1.msra.mxu0 0.0
    %1240 = vmatprep.subr.mxu0 0.0
    %1241 = vmatpush1.msra.mxu0 0.0
    %1242 = vmatprep.subr.mxu0 0.0
    %1243 = vmatpush1.msra.mxu0 0.0
    %1244 = vmatprep.mubr.f32.mxu0 0.0
    %1245 = vmatmul.mubr.f32.gmra.mrb[0].mxu0 %v1178
    %v1246 = vpop.f32.mrb[0].mxu0
    %v1247 = vadd.f32 0.0, %v1246
    %v1248 = vpop.f32.mrb[0].mxu0
    %1249 = vdwg.mxu0
    %v1250 = vadd.f32 %v1174, %v1247
    %v1251 = vxor.u32 %v1250, 2147483648
    %v1252 = vmul.f32 %v1251, 1.442695
    %v1253 = vpow.pop %v1252
    %v1254 = vadd.f32 %v1253, 1.0
    %v1255 = vrcp.pop %v1254
    %v1256 = vmul.f32 1.0, %v1255
    %v1257 = vtanh.pop %v1250
    %v1258 = vmul.f32 %v1256, %v1167
    %1260 = vrot.lane.b32.xlu0 %v1257, 64
    %v1261 = vpop.permute.xlu0 %1260
    %v1263 = vmul.f32 %v1256, %v1261
    %1265 = vrot.lane.b32.xlu0 %v1263, 32
    %v1266 = vpop.permute.xlu0 %1265
    %v1268 = vadd.f32 %v1258, %v1266
    %v1269 = vtanh.pop %v1268
    %1271 = vrot.lane.b32.xlu0 %v1269, 64
    %v1272 = vpop.permute.xlu0 %1271
    %v1274 = vmul.f32 %v1256, %v1272
    %v1275 = vld [vmem:[#allocation2 + $0x4] sm:$0x3]
    %1277 = vrot.lane.b32.xlu0 %v1274, 32
    %v1278 = vpop.permute.xlu0 %1277
    %v1279 = vsel %vm146, %v1278, 0
    %1281 = vmatprep.subr.mxu0 0.0
    %1282 = vmatpush1.msra.mxu0 %v1074
    %1283 = vmatprep.subr.mxu0 0.0
    %1284 = vmatpush1.msra.mxu0 %v1075
    %1285 = vmatprep.subr.mxu0 0.0
    %1286 = vmatpush1.msra.mxu0 %v1076
    %1287 = vmatprep.subr.mxu0 0.0
    %1288 = vmatpush1.msra.mxu0 %v1077
    %1289 = vmatprep.subr.mxu0 0.0
    %1290 = vmatpush1.msra.mxu0 0.0
    %1291 = vmatprep.subr.mxu0 0.0
    %1292 = vmatpush1.msra.mxu0 0.0
    %1293 = vmatprep.subr.mxu0 0.0
    %1294 = vmatpush1.msra.mxu0 0.0
    %1295 = vmatprep.subr.mxu0 0.0
    %1296 = vmatpush1.msra.mxu0 0.0
    %1297 = vmatprep.subr.mxu0 0.0
    %1298 = vmatpush1.msra.mxu0 0.0
    %1299 = vmatprep.subr.mxu0 0.0
    %1300 = vmatpush1.msra.mxu0 0.0
    %1301 = vmatprep.subr.mxu0 0.0
    %1302 = vmatpush1.msra.mxu0 0.0
    %1303 = vmatprep.subr.mxu0 0.0
    %1304 = vmatpush1.msra.mxu0 0.0
    %1305 = vmatprep.subr.mxu0 0.0
    %1306 = vmatpush1.msra.mxu0 0.0
    %1307 = vmatprep.subr.mxu0 0.0
    %1308 = vmatpush1.msra.mxu0 0.0
    %1309 = vmatprep.subr.mxu0 0.0
    %1310 = vmatpush1.msra.mxu0 0.0
    %1311 = vmatprep.subr.mxu0 0.0
    %1312 = vmatpush1.msra.mxu0 0.0
    %1313 = vmatprep.subr.mxu0 0.0
    %1314 = vmatpush1.msra.mxu0 0.0
    %1315 = vmatprep.subr.mxu0 0.0
    %1316 = vmatpush1.msra.mxu0 0.0
    %1317 = vmatprep.subr.mxu0 0.0
    %1318 = vmatpush1.msra.mxu0 0.0
    %1319 = vmatprep.subr.mxu0 0.0
    %1320 = vmatpush1.msra.mxu0 0.0
    %1321 = vmatprep.subr.mxu0 0.0
    %1322 = vmatpush1.msra.mxu0 0.0
    %1323 = vmatprep.subr.mxu0 0.0
    %1324 = vmatpush1.msra.mxu0 0.0
    %1325 = vmatprep.subr.mxu0 0.0
    %1326 = vmatpush1.msra.mxu0 0.0
    %1327 = vmatprep.subr.mxu0 0.0
    %1328 = vmatpush1.msra.mxu0 0.0
    %1329 = vmatprep.subr.mxu0 0.0
    %1330 = vmatpush1.msra.mxu0 0.0
    %1331 = vmatprep.subr.mxu0 0.0
    %1332 = vmatpush1.msra.mxu0 0.0
    %1333 = vmatprep.subr.mxu0 0.0
    %1334 = vmatpush1.msra.mxu0 0.0
    %1335 = vmatprep.subr.mxu0 0.0
    %1336 = vmatpush1.msra.mxu0 0.0
    %1337 = vmatprep.subr.mxu0 0.0
    %1338 = vmatpush1.msra.mxu0 0.0
    %1339 = vmatprep.subr.mxu0 0.0
    %1340 = vmatpush1.msra.mxu0 0.0
    %1341 = vmatprep.subr.mxu0 0.0
    %1342 = vmatpush1.msra.mxu0 0.0
    %1343 = vmatprep.subr.mxu0 0.0
    %1344 = vmatpush1.msra.mxu0 0.0
    %1345 = vmatprep.mubr.f32.mxu0 0.0
    %1346 = vmatmul.mubr.f32.gmra.mrb[0].mxu0 %v1279
    %v1347 = vpop.f32.mrb[0].mxu0
    %v1348 = vadd.f32 0.0, %v1347
    %v1349 = vpop.f32.mrb[0].mxu0
    %1350 = vdwg.mxu0
    %v1351 = vadd.f32 %v1275, %v1348
    %v1352 = vxor.u32 %v1351, 2147483648
    %v1353 = vmul.f32 %v1352, 1.442695
    %v1354 = vpow.pop %v1353
    %v1355 = vadd.f32 %v1354, 1.0
    %v1356 = vrcp.pop %v1355
    %v1357 = vmul.f32 1.0, %v1356
    %v1358 = vtanh.pop %v1351
    %v1359 = vmul.f32 %v1357, %v1268
    %1361 = vrot.lane.b32.xlu0 %v1358, 64
    %v1362 = vpop.permute.xlu0 %1361
    %v1364 = vmul.f32 %v1357, %v1362
    %1366 = vrot.lane.b32.xlu0 %v1364, 32
    %v1367 = vpop.permute.xlu0 %1366
    %v1369 = vadd.f32 %v1359, %v1367
    %v1370 = vtanh.pop %v1369
    %1372 = vrot.lane.b32.xlu0 %v1370, 64
    %v1373 = vpop.permute.xlu0 %1372
    %v1375 = vmul.f32 %v1357, %v1373
    %v1376 = vld [vmem:[#allocation2 + $0x6] sm:$0x3]
    %1378 = vrot.lane.b32.xlu0 %v1375, 32
    %v1379 = vpop.permute.xlu0 %1378
    %v1380 = vsel %vm146, %v1379, 0
    %1382 = vmatprep.subr.mxu0 0.0
    %1383 = vmatpush1.msra.mxu0 %v1074
    %1384 = vmatprep.subr.mxu0 0.0
    %1385 = vmatpush1.msra.mxu0 %v1075
    %1386 = vmatprep.subr.mxu0 0.0
    %1387 = vmatpush1.msra.mxu0 %v1076
    %1388 = vmatprep.subr.mxu0 0.0
    %1389 = vmatpush1.msra.mxu0 %v1077
    %1390 = vmatprep.subr.mxu0 0.0
    %1391 = vmatpush1.msra.mxu0 0.0
    %1392 = vmatprep.subr.mxu0 0.0
    %1393 = vmatpush1.msra.mxu0 0.0
    %1394 = vmatprep.subr.mxu0 0.0
    %1395 = vmatpush1.msra.mxu0 0.0
    %1396 = vmatprep.subr.mxu0 0.0
    %1397 = vmatpush1.msra.mxu0 0.0
    %1398 = vmatprep.subr.mxu0 0.0
    %1399 = vmatpush1.msra.mxu0 0.0
    %1400 = vmatprep.subr.mxu0 0.0
    %1401 = vmatpush1.msra.mxu0 0.0
    %1402 = vmatprep.subr.mxu0 0.0
    %1403 = vmatpush1.msra.mxu0 0.0
    %1404 = vmatprep.subr.mxu0 0.0
    %1405 = vmatpush1.msra.mxu0 0.0
    %1406 = vmatprep.subr.mxu0 0.0
    %1407 = vmatpush1.msra.mxu0 0.0
    %1408 = vmatprep.subr.mxu0 0.0
    %1409 = vmatpush1.msra.mxu0 0.0
    %1410 = vmatprep.subr.mxu0 0.0
    %1411 = vmatpush1.msra.mxu0 0.0
    %1412 = vmatprep.subr.mxu0 0.0
    %1413 = vmatpush1.msra.mxu0 0.0
    %1414 = vmatprep.subr.mxu0 0.0
    %1415 = vmatpush1.msra.mxu0 0.0
    %1416 = vmatprep.subr.mxu0 0.0
    %1417 = vmatpush1.msra.mxu0 0.0
    %1418 = vmatprep.subr.mxu0 0.0
    %1419 = vmatpush1.msra.mxu0 0.0
    %1420 = vmatprep.subr.mxu0 0.0
    %1421 = vmatpush1.msra.mxu0 0.0
    %1422 = vmatprep.subr.mxu0 0.0
    %1423 = vmatpush1.msra.mxu0 0.0
    %1424 = vmatprep.subr.mxu0 0.0
    %1425 = vmatpush1.msra.mxu0 0.0
    %1426 = vmatprep.subr.mxu0 0.0
    %1427 = vmatpush1.msra.mxu0 0.0
    %1428 = vmatprep.subr.mxu0 0.0
    %1429 = vmatpush1.msra.mxu0 0.0
    %1430 = vmatprep.subr.mxu0 0.0
    %1431 = vmatpush1.msra.mxu0 0.0
    %1432 = vmatprep.subr.mxu0 0.0
    %1433 = vmatpush1.msra.mxu0 0.0
    %1434 = vmatprep.subr.mxu0 0.0
    %1435 = vmatpush1.msra.mxu0 0.0
    %1436 = vmatprep.subr.mxu0 0.0
    %1437 = vmatpush1.msra.mxu0 0.0
    %1438 = vmatprep.subr.mxu0 0.0
    %1439 = vmatpush1.msra.mxu0 0.0
    %1440 = vmatprep.subr.mxu0 0.0
    %1441 = vmatpush1.msra.mxu0 0.0
    %1442 = vmatprep.subr.mxu0 0.0
    %1443 = vmatpush1.msra.mxu0 0.0
    %1444 = vmatprep.subr.mxu0 0.0
    %1445 = vmatpush1.msra.mxu0 0.0
    %1446 = vmatprep.mubr.f32.mxu0 0.0
    %1447 = vmatmul.mubr.f32.gmra.mrb[0].mxu0 %v1380
    %v1448 = vpop.f32.mrb[0].mxu0
    %v1449 = vadd.f32 0.0, %v1448
    %v1450 = vpop.f32.mrb[0].mxu0
    %1451 = vdwg.mxu0
    %v1452 = vadd.f32 %v1376, %v1449
    %v1453 = vxor.u32 %v1452, 2147483648
    %v1454 = vmul.f32 %v1453, 1.442695
    %v1455 = vpow.pop %v1454
    %v1456 = vadd.f32 %v1455, 1.0
    %v1457 = vrcp.pop %v1456
    %v1458 = vmul.f32 1.0, %v1457
    %v1459 = vtanh.pop %v1452
    %v1460 = vmul.f32 %v1458, %v1369
    %1462 = vrot.lane.b32.xlu0 %v1459, 64
    %v1463 = vpop.permute.xlu0 %1462
    %v1465 = vmul.f32 %v1458, %v1463
    %1467 = vrot.lane.b32.xlu0 %v1465, 32
    %v1468 = vpop.permute.xlu0 %1467
    %v1470 = vadd.f32 %v1460, %v1468
    %v1471 = vtanh.pop %v1470
    %1473 = vrot.lane.b32.xlu0 %v1471, 64
    %v1474 = vpop.permute.xlu0 %1473
    %v1476 = vmul.f32 %v1458, %v1474
    %v1477 = vld [vmem:[#allocation2 + $0x8] sm:$0x3]
    %1479 = vrot.lane.b32.xlu0 %v1476, 32
    %v1480 = vpop.permute.xlu0 %1479
    %v1481 = vsel %vm146, %v1480, 0
    %1483 = vmatprep.subr.mxu0 0.0
    %1484 = vmatpush1.msra.mxu0 %v1074
    %1485 = vmatprep.subr.mxu0 0.0
    %1486 = vmatpush1.msra.mxu0 %v1075
    %1487 = vmatprep.subr.mxu0 0.0
    %1488 = vmatpush1.msra.mxu0 %v1076
    %1489 = vmatprep.subr.mxu0 0.0
    %1490 = vmatpush1.msra.mxu0 %v1077
    %1491 = vmatprep.subr.mxu0 0.0
    %1492 = vmatpush1.msra.mxu0 0.0
    %1493 = vmatprep.subr.mxu0 0.0
    %1494 = vmatpush1.msra.mxu0 0.0
    %1495 = vmatprep.subr.mxu0 0.0
    %1496 = vmatpush1.msra.mxu0 0.0
    %1497 = vmatprep.subr.mxu0 0.0
    %1498 = vmatpush1.msra.mxu0 0.0
    %1499 = vmatprep.subr.mxu0 0.0
    %1500 = vmatpush1.msra.mxu0 0.0
    %1501 = vmatprep.subr.mxu0 0.0
    %1502 = vmatpush1.msra.mxu0 0.0
    %1503 = vmatprep.subr.mxu0 0.0
    %1504 = vmatpush1.msra.mxu0 0.0
    %1505 = vmatprep.subr.mxu0 0.0
    %1506 = vmatpush1.msra.mxu0 0.0
    %1507 = vmatprep.subr.mxu0 0.0
    %1508 = vmatpush1.msra.mxu0 0.0
    %1509 = vmatprep.subr.mxu0 0.0
    %1510 = vmatpush1.msra.mxu0 0.0
    %1511 = vmatprep.subr.mxu0 0.0
    %1512 = vmatpush1.msra.mxu0 0.0
    %1513 = vmatprep.subr.mxu0 0.0
    %1514 = vmatpush1.msra.mxu0 0.0
    %1515 = vmatprep.subr.mxu0 0.0
    %1516 = vmatpush1.msra.mxu0 0.0
    %1517 = vmatprep.subr.mxu0 0.0
    %1518 = vmatpush1.msra.mxu0 0.0
    %1519 = vmatprep.subr.mxu0 0.0
    %1520 = vmatpush1.msra.mxu0 0.0
    %1521 = vmatprep.subr.mxu0 0.0
    %1522 = vmatpush1.msra.mxu0 0.0
    %1523 = vmatprep.subr.mxu0 0.0
    %1524 = vmatpush1.msra.mxu0 0.0
    %1525 = vmatprep.subr.mxu0 0.0
    %1526 = vmatpush1.msra.mxu0 0.0
    %1527 = vmatprep.subr.mxu0 0.0
    %1528 = vmatpush1.msra.mxu0 0.0
    %1529 = vmatprep.subr.mxu0 0.0
    %1530 = vmatpush1.msra.mxu0 0.0
    %1531 = vmatprep.subr.mxu0 0.0
    %1532 = vmatpush1.msra.mxu0 0.0
    %1533 = vmatprep.subr.mxu0 0.0
    %1534 = vmatpush1.msra.mxu0 0.0
    %1535 = vmatprep.subr.mxu0 0.0
    %1536 = vmatpush1.msra.mxu0 0.0
    %1537 = vmatprep.subr.mxu0 0.0
    %1538 = vmatpush1.msra.mxu0 0.0
    %1539 = vmatprep.subr.mxu0 0.0
    %1540 = vmatpush1.msra.mxu0 0.0
    %1541 = vmatprep.subr.mxu0 0.0
    %1542 = vmatpush1.msra.mxu0 0.0
    %1543 = vmatprep.subr.mxu0 0.0
    %1544 = vmatpush1.msra.mxu0 0.0
    %1545 = vmatprep.subr.mxu0 0.0
    %1546 = vmatpush1.msra.mxu0 0.0
    %1547 = vmatprep.mubr.f32.mxu0 0.0
    %1548 = vmatmul.mubr.f32.gmra.mrb[0].mxu0 %v1481
    %v1549 = vpop.f32.mrb[0].mxu0
    %v1550 = vadd.f32 0.0, %v1549
    %v1551 = vpop.f32.mrb[0].mxu0
    %1552 = vdwg.mxu0
    %v1553 = vadd.f32 %v1477, %v1550
    %v1554 = vxor.u32 %v1553, 2147483648
    %v1555 = vmul.f32 %v1554, 1.442695
    %v1556 = vpow.pop %v1555
    %v1557 = vadd.f32 %v1556, 1.0
    %v1558 = vrcp.pop %v1557
    %v1559 = vmul.f32 1.0, %v1558
    %v1560 = vtanh.pop %v1553
    %v1561 = vmul.f32 %v1559, %v1470
    %1563 = vrot.lane.b32.xlu0 %v1560, 64
    %v1564 = vpop.permute.xlu0 %1563
    %v1566 = vmul.f32 %v1559, %v1564
    %1568 = vrot.lane.b32.xlu0 %v1566, 32
    %v1569 = vpop.permute.xlu0 %1568
    %v1571 = vadd.f32 %v1561, %v1569
    %v1572 = vtanh.pop %v1571
    %1574 = vrot.lane.b32.xlu0 %v1572, 64
    %v1575 = vpop.permute.xlu0 %1574
    %v1577 = vmul.f32 %v1559, %v1575
    %v1578 = vld [vmem:[#allocation2 + $0xa] sm:$0x3]
    %1580 = vrot.lane.b32.xlu0 %v1577, 32
    %v1581 = vpop.permute.xlu0 %1580
    %v1582 = vsel %vm146, %v1581, 0
    %1584 = vmatprep.subr.mxu0 0.0
    %1585 = vmatpush1.msra.mxu0 %v1074
    %1586 = vmatprep.subr.mxu0 0.0
    %1587 = vmatpush1.msra.mxu0 %v1075
    %1588 = vmatprep.subr.mxu0 0.0
    %1589 = vmatpush1.msra.mxu0 %v1076
    %1590 = vmatprep.subr.mxu0 0.0
    %1591 = vmatpush1.msra.mxu0 %v1077
    %1592 = vmatprep.subr.mxu0 0.0
    %1593 = vmatpush1.msra.mxu0 0.0
    %1594 = vmatprep.subr.mxu0 0.0
    %1595 = vmatpush1.msra.mxu0 0.0
    %1596 = vmatprep.subr.mxu0 0.0
    %1597 = vmatpush1.msra.mxu0 0.0
    %1598 = vmatprep.subr.mxu0 0.0
    %1599 = vmatpush1.msra.mxu0 0.0
    %1600 = vmatprep.subr.mxu0 0.0
    %1601 = vmatpush1.msra.mxu0 0.0
    %1602 = vmatprep.subr.mxu0 0.0
    %1603 = vmatpush1.msra.mxu0 0.0
    %1604 = vmatprep.subr.mxu0 0.0
    %1605 = vmatpush1.msra.mxu0 0.0
    %1606 = vmatprep.subr.mxu0 0.0
    %1607 = vmatpush1.msra.mxu0 0.0
    %1608 = vmatprep.subr.mxu0 0.0
    %1609 = vmatpush1.msra.mxu0 0.0
    %1610 = vmatprep.subr.mxu0 0.0
    %1611 = vmatpush1.msra.mxu0 0.0
    %1612 = vmatprep.subr.mxu0 0.0
    %1613 = vmatpush1.msra.mxu0 0.0
    %1614 = vmatprep.subr.mxu0 0.0
    %1615 = vmatpush1.msra.mxu0 0.0
    %1616 = vmatprep.subr.mxu0 0.0
    %1617 = vmatpush1.msra.mxu0 0.0
    %1618 = vmatprep.subr.mxu0 0.0
    %1619 = vmatpush1.msra.mxu0 0.0
    %1620 = vmatprep.subr.mxu0 0.0
    %1621 = vmatpush1.msra.mxu0 0.0
    %1622 = vmatprep.subr.mxu0 0.0
    %1623 = vmatpush1.msra.mxu0 0.0
    %1624 = vmatprep.subr.mxu0 0.0
    %1625 = vmatpush1.msra.mxu0 0.0
    %1626 = vmatprep.subr.mxu0 0.0
    %1627 = vmatpush1.msra.mxu0 0.0
    %1628 = vmatprep.subr.mxu0 0.0
    %1629 = vmatpush1.msra.mxu0 0.0
    %1630 = vmatprep.subr.mxu0 0.0
    %1631 = vmatpush1.msra.mxu0 0.0
    %1632 = vmatprep.subr.mxu0 0.0
    %1633 = vmatpush1.msra.mxu0 0.0
    %1634 = vmatprep.subr.mxu0 0.0
    %1635 = vmatpush1.msra.mxu0 0.0
    %1636 = vmatprep.subr.mxu0 0.0
    %1637 = vmatpush1.msra.mxu0 0.0
    %1638 = vmatprep.subr.mxu0 0.0
    %1639 = vmatpush1.msra.mxu0 0.0
    %1640 = vmatprep.subr.mxu0 0.0
    %1641 = vmatpush1.msra.mxu0 0.0
    %1642 = vmatprep.subr.mxu0 0.0
    %1643 = vmatpush1.msra.mxu0 0.0
    %1644 = vmatprep.subr.mxu0 0.0
    %1645 = vmatpush1.msra.mxu0 0.0
    %1646 = vmatprep.subr.mxu0 0.0
    %1647 = vmatpush1.msra.mxu0 0.0
    %1648 = vmatprep.mubr.f32.mxu0 0.0
    %1649 = vmatmul.mubr.f32.gmra.mrb[0].mxu0 %v1582
    %v1650 = vpop.f32.mrb[0].mxu0
    %v1651 = vadd.f32 0.0, %v1650
    %v1652 = vpop.f32.mrb[0].mxu0
    %1653 = vdwg.mxu0
    %v1654 = vadd.f32 %v1578, %v1651
    %v1655 = vxor.u32 %v1654, 2147483648
    %v1656 = vmul.f32 %v1655, 1.442695
    %v1657 = vpow.pop %v1656
    %v1658 = vadd.f32 %v1657, 1.0
    %v1659 = vrcp.pop %v1658
    %v1660 = vmul.f32 1.0, %v1659
    %v1661 = vtanh.pop %v1654
    %v1662 = vmul.f32 %v1660, %v1571
    %1664 = vrot.lane.b32.xlu0 %v1661, 64
    %v1665 = vpop.permute.xlu0 %1664
    %v1667 = vmul.f32 %v1660, %v1665
    %1669 = vrot.lane.b32.xlu0 %v1667, 32
    %v1670 = vpop.permute.xlu0 %1669
    %v1672 = vadd.f32 %v1662, %v1670
    %v1673 = vtanh.pop %v1672
    %1675 = vrot.lane.b32.xlu0 %v1673, 64
    %v1676 = vpop.permute.xlu0 %1675
    %v1678 = vmul.f32 %v1660, %v1676
    %v1679 = vld [vmem:[#allocation2 + $0xc] sm:$0x3]
    %1681 = vrot.lane.b32.xlu0 %v1678, 32
    %v1682 = vpop.permute.xlu0 %1681
    %v1683 = vsel %vm146, %v1682, 0
    %1685 = vmatprep.subr.mxu0 0.0
    %1686 = vmatpush1.msra.mxu0 %v1074
    %1687 = vmatprep.subr.mxu0 0.0
    %1688 = vmatpush1.msra.mxu0 %v1075
    %1689 = vmatprep.subr.mxu0 0.0
    %1690 = vmatpush1.msra.mxu0 %v1076
    %1691 = vmatprep.subr.mxu0 0.0
    %1692 = vmatpush1.msra.mxu0 %v1077
    %1693 = vmatprep.subr.mxu0 0.0
    %1694 = vmatpush1.msra.mxu0 0.0
    %1695 = vmatprep.subr.mxu0 0.0
    %1696 = vmatpush1.msra.mxu0 0.0
    %1697 = vmatprep.subr.mxu0 0.0
    %1698 = vmatpush1.msra.mxu0 0.0
    %1699 = vmatprep.subr.mxu0 0.0
    %1700 = vmatpush1.msra.mxu0 0.0
    %1701 = vmatprep.subr.mxu0 0.0
    %1702 = vmatpush1.msra.mxu0 0.0
    %1703 = vmatprep.subr.mxu0 0.0
    %1704 = vmatpush1.msra.mxu0 0.0
    %1705 = vmatprep.subr.mxu0 0.0
    %1706 = vmatpush1.msra.mxu0 0.0
    %1707 = vmatprep.subr.mxu0 0.0
    %1708 = vmatpush1.msra.mxu0 0.0
    %1709 = vmatprep.subr.mxu0 0.0
    %1710 = vmatpush1.msra.mxu0 0.0
    %1711 = vmatprep.subr.mxu0 0.0
    %1712 = vmatpush1.msra.mxu0 0.0
    %1713 = vmatprep.subr.mxu0 0.0
    %1714 = vmatpush1.msra.mxu0 0.0
    %1715 = vmatprep.subr.mxu0 0.0
    %1716 = vmatpush1.msra.mxu0 0.0
    %1717 = vmatprep.subr.mxu0 0.0
    %1718 = vmatpush1.msra.mxu0 0.0
    %1719 = vmatprep.subr.mxu0 0.0
    %1720 = vmatpush1.msra.mxu0 0.0
    %1721 = vmatprep.subr.mxu0 0.0
    %1722 = vmatpush1.msra.mxu0 0.0
    %1723 = vmatprep.subr.mxu0 0.0
    %1724 = vmatpush1.msra.mxu0 0.0
    %1725 = vmatprep.subr.mxu0 0.0
    %1726 = vmatpush1.msra.mxu0 0.0
    %1727 = vmatprep.subr.mxu0 0.0
    %1728 = vmatpush1.msra.mxu0 0.0
    %1729 = vmatprep.subr.mxu0 0.0
    %1730 = vmatpush1.msra.mxu0 0.0
    %1731 = vmatprep.subr.mxu0 0.0
    %1732 = vmatpush1.msra.mxu0 0.0
    %1733 = vmatprep.subr.mxu0 0.0
    %1734 = vmatpush1.msra.mxu0 0.0
    %1735 = vmatprep.subr.mxu0 0.0
    %1736 = vmatpush1.msra.mxu0 0.0
    %1737 = vmatprep.subr.mxu0 0.0
    %1738 = vmatpush1.msra.mxu0 0.0
    %1739 = vmatprep.subr.mxu0 0.0
    %1740 = vmatpush1.msra.mxu0 0.0
    %1741 = vmatprep.subr.mxu0 0.0
    %1742 = vmatpush1.msra.mxu0 0.0
    %1743 = vmatprep.subr.mxu0 0.0
    %1744 = vmatpush1.msra.mxu0 0.0
    %1745 = vmatprep.subr.mxu0 0.0
    %1746 = vmatpush1.msra.mxu0 0.0
    %1747 = vmatprep.subr.mxu0 0.0
    %1748 = vmatpush1.msra.mxu0 0.0
    %1749 = vmatprep.mubr.f32.mxu0 0.0
    %1750 = vmatmul.mubr.f32.gmra.mrb[0].mxu0 %v1683
    %v1751 = vpop.f32.mrb[0].mxu0
    %v1752 = vadd.f32 0.0, %v1751
    %v1753 = vpop.f32.mrb[0].mxu0
    %1754 = vdwg.mxu0
    %v1755 = vadd.f32 %v1679, %v1752
    %v1756 = vxor.u32 %v1755, 2147483648
    %v1757 = vmul.f32 %v1756, 1.442695
    %v1758 = vpow.pop %v1757
    %v1759 = vadd.f32 %v1758, 1.0
    %v1760 = vrcp.pop %v1759
    %v1761 = vmul.f32 1.0, %v1760
    %v1762 = vtanh.pop %v1755
    %v1763 = vmul.f32 %v1761, %v1672
    %1765 = vrot.lane.b32.xlu0 %v1762, 64
    %v1766 = vpop.permute.xlu0 %1765
    %v1768 = vmul.f32 %v1761, %v1766
    %1770 = vrot.lane.b32.xlu0 %v1768, 32
    %v1771 = vpop.permute.xlu0 %1770
    %v1773 = vadd.f32 %v1763, %v1771
    %v1774 = vtanh.pop %v1773
    %1776 = vrot.lane.b32.xlu0 %v1774, 64
    %v1777 = vpop.permute.xlu0 %1776
    %v1779 = vmul.f32 %v1761, %v1777
    %v1780 = vld [vmem:[#allocation2 + $0xe] sm:$0x3]
    %1782 = vrot.lane.b32.xlu0 %v1779, 32
    %v1783 = vpop.permute.xlu0 %1782
    %v1784 = vsel %vm146, %v1783, 0
    %1786 = vmatprep.subr.mxu0 0.0
    %1787 = vmatpush1.msra.mxu0 %v1074
    %1788 = vmatprep.subr.mxu0 0.0
    %1789 = vmatpush1.msra.mxu0 %v1075
    %1790 = vmatprep.subr.mxu0 0.0
    %1791 = vmatpush1.msra.mxu0 %v1076
    %1792 = vmatprep.subr.mxu0 0.0
    %1793 = vmatpush1.msra.mxu0 %v1077
    %1794 = vmatprep.subr.mxu0 0.0
    %1795 = vmatpush1.msra.mxu0 0.0
    %1796 = vmatprep.subr.mxu0 0.0
    %1797 = vmatpush1.msra.mxu0 0.0
    %1798 = vmatprep.subr.mxu0 0.0
    %1799 = vmatpush1.msra.mxu0 0.0
    %1800 = vmatprep.subr.mxu0 0.0
    %1801 = vmatpush1.msra.mxu0 0.0
    %1802 = vmatprep.subr.mxu0 0.0
    %1803 = vmatpush1.msra.mxu0 0.0
    %1804 = vmatprep.subr.mxu0 0.0
    %1805 = vmatpush1.msra.mxu0 0.0
    %1806 = vmatprep.subr.mxu0 0.0
    %1807 = vmatpush1.msra.mxu0 0.0
    %1808 = vmatprep.subr.mxu0 0.0
    %1809 = vmatpush1.msra.mxu0 0.0
    %1810 = vmatprep.subr.mxu0 0.0
    %1811 = vmatpush1.msra.mxu0 0.0
    %1812 = vmatprep.subr.mxu0 0.0
    %1813 = vmatpush1.msra.mxu0 0.0
    %1814 = vmatprep.subr.mxu0 0.0
    %1815 = vmatpush1.msra.mxu0 0.0
    %1816 = vmatprep.subr.mxu0 0.0
    %1817 = vmatpush1.msra.mxu0 0.0
    %1818 = vmatprep.subr.mxu0 0.0
    %1819 = vmatpush1.msra.mxu0 0.0
    %1820 = vmatprep.subr.mxu0 0.0
    %1821 = vmatpush1.msra.mxu0 0.0
    %1822 = vmatprep.subr.mxu0 0.0
    %1823 = vmatpush1.msra.mxu0 0.0
    %1824 = vmatprep.subr.mxu0 0.0
    %1825 = vmatpush1.msra.mxu0 0.0
    %1826 = vmatprep.subr.mxu0 0.0
    %1827 = vmatpush1.msra.mxu0 0.0
    %1828 = vmatprep.subr.mxu0 0.0
    %1829 = vmatpush1.msra.mxu0 0.0
    %1830 = vmatprep.subr.mxu0 0.0
    %1831 = vmatpush1.msra.mxu0 0.0
    %1832 = vmatprep.subr.mxu0 0.0
    %1833 = vmatpush1.msra.mxu0 0.0
    %1834 = vmatprep.subr.mxu0 0.0
    %1835 = vmatpush1.msra.mxu0 0.0
    %1836 = vmatprep.subr.mxu0 0.0
    %1837 = vmatpush1.msra.mxu0 0.0
    %1838 = vmatprep.subr.mxu0 0.0
    %1839 = vmatpush1.msra.mxu0 0.0
    %1840 = vmatprep.subr.mxu0 0.0
    %1841 = vmatpush1.msra.mxu0 0.0
    %1842 = vmatprep.subr.mxu0 0.0
    %1843 = vmatpush1.msra.mxu0 0.0
    %1844 = vmatprep.subr.mxu0 0.0
    %1845 = vmatpush1.msra.mxu0 0.0
    %1846 = vmatprep.subr.mxu0 0.0
    %1847 = vmatpush1.msra.mxu0 0.0
    %1848 = vmatprep.subr.mxu0 0.0
    %1849 = vmatpush1.msra.mxu0 0.0
    %1850 = vmatprep.mubr.f32.mxu0 0.0
    %1851 = vmatmul.mubr.f32.gmra.mrb[0].mxu0 %v1784
    %v1852 = vpop.f32.mrb[0].mxu0
    %v1853 = vadd.f32 0.0, %v1852
    %v1854 = vpop.f32.mrb[0].mxu0
    %1855 = vdwg.mxu0
    %v1856 = vadd.f32 %v1780, %v1853
    %v1857 = vxor.u32 %v1856, 2147483648
    %v1858 = vmul.f32 %v1857, 1.442695
    %v1859 = vpow.pop %v1858
    %v1860 = vadd.f32 %v1859, 1.0
    %v1861 = vrcp.pop %v1860
    %v1862 = vmul.f32 1.0, %v1861
    %v1863 = vtanh.pop %v1856
    %v1864 = vmul.f32 %v1862, %v1773
    %1866 = vrot.lane.b32.xlu0 %v1863, 64
    %v1867 = vpop.permute.xlu0 %1866
    %v1869 = vmul.f32 %v1862, %v1867
    %1871 = vrot.lane.b32.xlu0 %v1869, 32
    %v1872 = vpop.permute.xlu0 %1871
    %v1874 = vadd.f32 %v1864, %v1872
    %v1875 = vtanh.pop %v1874
    %1877 = vrot.lane.b32.xlu0 %v1875, 64
    %v1878 = vpop.permute.xlu0 %1877
    %v1880 = vmul.f32 %v1862, %v1878
    %1882 = vrot.lane.b32.xlu0 %v1880, 32
    %v1883 = vpop.permute.xlu0 %1882
    %s1885 = scalar_lea.vmem [#allocation6], 2
    %1886 = vst.msk [vmem:[%s1885] sm:$0x3] %vm249, %v1883
    %1888 = vrot.lane.b32.xlu0 %v1874, 96
    %v1889 = vpop.permute.xlu0 %1888
    %s1891 = scalar_lea.vmem [#allocation8], 2
    %1892 = vst.msk [vmem:[%s1891] sm:$0x3] %vm249, %v1889
    %v1893 = vld [vmem:[%s7] sm:$0xff]
    %v1894 = vld [vmem:[%s7 + $0x8] sm:$0xff]
    %v1895 = vld [vmem:[%s7 + $0x10] sm:$0xff]
    %v1896 = vld [vmem:[%s7 + $0x18] sm:$0xff]
    %v1897 = vld [vmem:[%s8] sm:$0x1]
    %v1899 = vlaneseq
    %v1900 = vshrl.u32 %v1899, 7
    %v1901 = vsub.s32 0, %v1900
    %v1902 = vrot.slane %v1897, %v1901
    %v1904 = vsel %vm146, %v1883, 0
    %1906 = vmatprep.subr.mxu0 0.0
    %1907 = vmatpush1.msra.mxu0 %v1893
    %1908 = vmatprep.subr.mxu0 0.0
    %1909 = vmatpush1.msra.mxu0 %v1894
    %1910 = vmatprep.subr.mxu0 0.0
    %1911 = vmatpush1.msra.mxu0 %v1895
    %1912 = vmatprep.subr.mxu0 0.0
    %1913 = vmatpush1.msra.mxu0 %v1896
    %1914 = vmatprep.subr.mxu0 0.0
    %1915 = vmatpush1.msra.mxu0 0.0
    %1916 = vmatprep.subr.mxu0 0.0
    %1917 = vmatpush1.msra.mxu0 0.0
    %1918 = vmatprep.subr.mxu0 0.0
    %1919 = vmatpush1.msra.mxu0 0.0
    %1920 = vmatprep.subr.mxu0 0.0
    %1921 = vmatpush1.msra.mxu0 0.0
    %1922 = vmatprep.subr.mxu0 0.0
    %1923 = vmatpush1.msra.mxu0 0.0
    %1924 = vmatprep.subr.mxu0 0.0
    %1925 = vmatpush1.msra.mxu0 0.0
    %1926 = vmatprep.subr.mxu0 0.0
    %1927 = vmatpush1.msra.mxu0 0.0
    %1928 = vmatprep.subr.mxu0 0.0
    %1929 = vmatpush1.msra.mxu0 0.0
    %1930 = vmatprep.subr.mxu0 0.0
    %1931 = vmatpush1.msra.mxu0 0.0
    %1932 = vmatprep.subr.mxu0 0.0
    %1933 = vmatpush1.msra.mxu0 0.0
    %1934 = vmatprep.subr.mxu0 0.0
    %1935 = vmatpush1.msra.mxu0 0.0
    %1936 = vmatprep.subr.mxu0 0.0
    %1937 = vmatpush1.msra.mxu0 0.0
    %1938 = vmatprep.subr.mxu0 0.0
    %1939 = vmatpush1.msra.mxu0 0.0
    %1940 = vmatprep.subr.mxu0 0.0
    %1941 = vmatpush1.msra.mxu0 0.0
    %1942 = vmatprep.subr.mxu0 0.0
    %1943 = vmatpush1.msra.mxu0 0.0
    %1944 = vmatprep.subr.mxu0 0.0
    %1945 = vmatpush1.msra.mxu0 0.0
    %1946 = vmatprep.subr.mxu0 0.0
    %1947 = vmatpush1.msra.mxu0 0.0
    %1948 = vmatprep.subr.mxu0 0.0
    %1949 = vmatpush1.msra.mxu0 0.0
    %1950 = vmatprep.subr.mxu0 0.0
    %1951 = vmatpush1.msra.mxu0 0.0
    %1952 = vmatprep.subr.mxu0 0.0
    %1953 = vmatpush1.msra.mxu0 0.0
    %1954 = vmatprep.subr.mxu0 0.0
    %1955 = vmatpush1.msra.mxu0 0.0
    %1956 = vmatprep.subr.mxu0 0.0
    %1957 = vmatpush1.msra.mxu0 0.0
    %1958 = vmatprep.subr.mxu0 0.0
    %1959 = vmatpush1.msra.mxu0 0.0
    %1960 = vmatprep.subr.mxu0 0.0
    %1961 = vmatpush1.msra.mxu0 0.0
    %1962 = vmatprep.subr.mxu0 0.0
    %1963 = vmatpush1.msra.mxu0 0.0
    %1964 = vmatprep.subr.mxu0 0.0
    %1965 = vmatpush1.msra.mxu0 0.0
    %1966 = vmatprep.subr.mxu0 0.0
    %1967 = vmatpush1.msra.mxu0 0.0
    %1968 = vmatprep.subr.mxu0 0.0
    %1969 = vmatpush1.msra.mxu0 0.0
    %1970 = vmatprep.mubr.f32.mxu0 0.0
    %1971 = vmatmul.mubr.f32.gmra.mrb[0].mxu0 %v1904
    %v1972 = vpop.f32.mrb[0].mxu0
    %v1973 = vadd.f32 %v1902, %v1972
    %v1974 = vpop.f32.mrb[0].mxu0
    %1975 = vdwg.mxu0
    %v1977 = vsel %vm146, %v1973, 0
    %1979 = vmatprep.subr.mxu0 0.0
    %1980 = vmatpush1.msra.mxu0 %v1893
    %1981 = vmatprep.subr.mxu0 0.0
    %1982 = vmatpush1.msra.mxu0 %v1894
    %1983 = vmatprep.subr.mxu0 0.0
    %1984 = vmatpush1.msra.mxu0 %v1895
    %1985 = vmatprep.subr.mxu0 0.0
    %1986 = vmatpush1.msra.mxu0 %v1896
    %1987 = vmatprep.subr.mxu0 0.0
    %1988 = vmatpush1.msra.mxu0 0.0
    %1989 = vmatprep.subr.mxu0 0.0
    %1990 = vmatpush1.msra.mxu0 0.0
    %1991 = vmatprep.subr.mxu0 0.0
    %1992 = vmatpush1.msra.mxu0 0.0
    %1993 = vmatprep.subr.mxu0 0.0
    %1994 = vmatpush1.msra.mxu0 0.0
    %1995 = vmatprep.subr.mxu0 0.0
    %1996 = vmatpush1.msra.mxu0 0.0
    %1997 = vmatprep.subr.mxu0 0.0
    %1998 = vmatpush1.msra.mxu0 0.0
    %1999 = vmatprep.subr.mxu0 0.0
    %2000 = vmatpush1.msra.mxu0 0.0
    %2001 = vmatprep.subr.mxu0 0.0
    %2002 = vmatpush1.msra.mxu0 0.0
    %2003 = vmatprep.subr.mxu0 0.0
    %2004 = vmatpush1.msra.mxu0 0.0
    %2005 = vmatprep.subr.mxu0 0.0
    %2006 = vmatpush1.msra.mxu0 0.0
    %2007 = vmatprep.subr.mxu0 0.0
    %2008 = vmatpush1.msra.mxu0 0.0
    %2009 = vmatprep.subr.mxu0 0.0
    %2010 = vmatpush1.msra.mxu0 0.0
    %2011 = vmatprep.subr.mxu0 0.0
    %2012 = vmatpush1.msra.mxu0 0.0
    %2013 = vmatprep.subr.mxu0 0.0
    %2014 = vmatpush1.msra.mxu0 0.0
    %2015 = vmatprep.subr.mxu0 0.0
    %2016 = vmatpush1.msra.mxu0 0.0
    %2017 = vmatprep.subr.mxu0 0.0
    %2018 = vmatpush1.msra.mxu0 0.0
    %2019 = vmatprep.subr.mxu0 0.0
    %2020 = vmatpush1.msra.mxu0 0.0
    %2021 = vmatprep.subr.mxu0 0.0
    %2022 = vmatpush1.msra.mxu0 0.0
    %2023 = vmatprep.subr.mxu0 0.0
    %2024 = vmatpush1.msra.mxu0 0.0
    %2025 = vmatprep.subr.mxu0 0.0
    %2026 = vmatpush1.msra.mxu0 0.0
    %2027 = vmatprep.subr.mxu0 0.0
    %2028 = vmatpush1.msra.mxu0 0.0
    %2029 = vmatprep.subr.mxu0 0.0
    %2030 = vmatpush1.msra.mxu0 0.0
    %2031 = vmatprep.subr.mxu0 0.0
    %2032 = vmatpush1.msra.mxu0 0.0
    %2033 = vmatprep.subr.mxu0 0.0
    %2034 = vmatpush1.msra.mxu0 0.0
    %2035 = vmatprep.subr.mxu0 0.0
    %2036 = vmatpush1.msra.mxu0 0.0
    %2037 = vmatprep.subr.mxu0 0.0
    %2038 = vmatpush1.msra.mxu0 0.0
    %2039 = vmatprep.subr.mxu0 0.0
    %2040 = vmatpush1.msra.mxu0 0.0
    %2041 = vmatprep.subr.mxu0 0.0
    %2042 = vmatpush1.msra.mxu0 0.0
    %2043 = vmatprep.mubr.f32.mxu0 0.0
    %2044 = vmatmul.mubr.f32.gmra.mrb[0].mxu0 %v1977
    %v2045 = vpop.f32.mrb[0].mxu0
    %v2046 = vadd.f32 %v1902, %v2045
    %v2047 = vpop.f32.mrb[0].mxu0
    %2048 = vdwg.mxu0
    %v2049 = vld [vmem:[%s9] sm:$0xff]
    %v2050 = vld [vmem:[%s9 + $0x8] sm:$0xff]
    %v2051 = vld [vmem:[%s9 + $0x10] sm:$0xff]
    %v2052 = vld [vmem:[%s9 + $0x18] sm:$0xff]
    %v2053 = vld [vmem:[%s10] sm:$0x1]
    %v2055 = vlaneseq
    %v2056 = vshrl.u32 %v2055, 7
    %v2057 = vsub.s32 0, %v2056
    %v2058 = vrot.slane %v2053, %v2057
    %v2061 = vsel %vm146, %v2046, 0
    %2063 = vmatprep.subr.mxu0 0.0
    %2064 = vmatpush1.msra.mxu0 %v2049
    %2065 = vmatprep.subr.mxu0 0.0
    %2066 = vmatpush1.msra.mxu0 %v2050
    %2067 = vmatprep.subr.mxu0 0.0
    %2068 = vmatpush1.msra.mxu0 %v2051
    %2069 = vmatprep.subr.mxu0 0.0
    %2070 = vmatpush1.msra.mxu0 %v2052
    %2071 = vmatprep.subr.mxu0 0.0
    %2072 = vmatpush1.msra.mxu0 0.0
    %2073 = vmatprep.subr.mxu0 0.0
    %2074 = vmatpush1.msra.mxu0 0.0
    %2075 = vmatprep.subr.mxu0 0.0
    %2076 = vmatpush1.msra.mxu0 0.0
    %2077 = vmatprep.subr.mxu0 0.0
    %2078 = vmatpush1.msra.mxu0 0.0
    %2079 = vmatprep.subr.mxu0 0.0
    %2080 = vmatpush1.msra.mxu0 0.0
    %2081 = vmatprep.subr.mxu0 0.0
    %2082 = vmatpush1.msra.mxu0 0.0
    %2083 = vmatprep.subr.mxu0 0.0
    %2084 = vmatpush1.msra.mxu0 0.0
    %2085 = vmatprep.subr.mxu0 0.0
    %2086 = vmatpush1.msra.mxu0 0.0
    %2087 = vmatprep.subr.mxu0 0.0
    %2088 = vmatpush1.msra.mxu0 0.0
    %2089 = vmatprep.subr.mxu0 0.0
    %2090 = vmatpush1.msra.mxu0 0.0
    %2091 = vmatprep.subr.mxu0 0.0
    %2092 = vmatpush1.msra.mxu0 0.0
    %2093 = vmatprep.subr.mxu0 0.0
    %2094 = vmatpush1.msra.mxu0 0.0
    %2095 = vmatprep.subr.mxu0 0.0
    %2096 = vmatpush1.msra.mxu0 0.0
    %2097 = vmatprep.subr.mxu0 0.0
    %2098 = vmatpush1.msra.mxu0 0.0
    %2099 = vmatprep.subr.mxu0 0.0
    %2100 = vmatpush1.msra.mxu0 0.0
    %2101 = vmatprep.subr.mxu0 0.0
    %2102 = vmatpush1.msra.mxu0 0.0
    %2103 = vmatprep.subr.mxu0 0.0
    %2104 = vmatpush1.msra.mxu0 0.0
    %2105 = vmatprep.subr.mxu0 0.0
    %2106 = vmatpush1.msra.mxu0 0.0
    %2107 = vmatprep.subr.mxu0 0.0
    %2108 = vmatpush1.msra.mxu0 0.0
    %2109 = vmatprep.subr.mxu0 0.0
    %2110 = vmatpush1.msra.mxu0 0.0
    %2111 = vmatprep.subr.mxu0 0.0
    %2112 = vmatpush1.msra.mxu0 0.0
    %2113 = vmatprep.subr.mxu0 0.0
    %2114 = vmatpush1.msra.mxu0 0.0
    %2115 = vmatprep.subr.mxu0 0.0
    %2116 = vmatpush1.msra.mxu0 0.0
    %2117 = vmatprep.subr.mxu0 0.0
    %2118 = vmatpush1.msra.mxu0 0.0
    %2119 = vmatprep.subr.mxu0 0.0
    %2120 = vmatpush1.msra.mxu0 0.0
    %2121 = vmatprep.subr.mxu0 0.0
    %2122 = vmatpush1.msra.mxu0 0.0
    %2123 = vmatprep.subr.mxu0 0.0
    %2124 = vmatpush1.msra.mxu0 0.0
    %2125 = vmatprep.subr.mxu0 0.0
    %2126 = vmatpush1.msra.mxu0 0.0
    %2127 = vmatprep.mubr.f32.mxu0 0.0
    %2128 = vmatmul.mubr.f32.gmra.mrb[0].mxu0 %v2061
    %v2129 = vpop.f32.mrb[0].mxu0
    %v2130 = vadd.f32 %v2058, %v2129
    %v2131 = vpop.f32.mrb[0].mxu0
    %2132 = vdwg.mxu0
    %vm2133 = vcmask 25600
    %2134 = vst.msk [vmem:[#allocation4] sm:$0x3] %vm2133, %v2130
    // Predicated region
    $region46: #{lstm_model_forward.1} parent=1 // pred_check
      _
    $region47: #{lstm_model_forward.1} parent=1 // pred_check_branch
      %2136 = sbr.rel (0) target = $region49
    $region48: #{lstm_model_forward.1} parent=1 // pred_region
      %s2138 = ssub.s32 32, 32
      %2139 = vsyncadd [#allocation5], %s2138
      %s2141 = sshll.u32 [#allocation4], 4
      %s2142 = int_to_ptr.vmem [resolvable:$true] %s2141
      %2144 = dma.vmem_to_hbm [thread:$0]  %s2142, 32, %s11, [#allocation5]
    $region49: #{lstm_model_forward.1} parent=1 // pred_fallthru
      _
    // Predicated region
    $region50: #{lstm_model_forward.1} parent=1 // pred_check
      _
    $region51: #{lstm_model_forward.1} parent=1 // pred_check_branch
      %2146 = sbr.rel (0) target = $region53
    $region52: #{lstm_model_forward.1} parent=1 // pred_region
      %s2148 = ssub.s32 64, 64
      %2149 = vsyncadd [#allocation7], %s2148
      %s2150 = sshll.u32 [#allocation6], 4
      %s2151 = int_to_ptr.vmem [resolvable:$true] %s2150
      %2156 = dma.vmem_to_hbm [thread:$0]  %s2151, 64, %s12, [#allocation7], 32, 32, 2
    $region53: #{lstm_model_forward.1} parent=1 // pred_fallthru
      _
    // Predicated region
    $region54: #{lstm_model_forward.1} parent=1 // pred_check
      _
    $region55: #{lstm_model_forward.1} parent=1 // pred_check_branch
      %2158 = sbr.rel (0) target = $region57
    $region56: #{lstm_model_forward.1} parent=1 // pred_region
      %s2160 = ssub.s32 64, 64
      %2161 = vsyncadd [#allocation7], %s2160
      %s2162 = sshll.u32 [#allocation8], 4
      %s2163 = int_to_ptr.vmem [resolvable:$true] %s2162
      %2168 = dma.vmem_to_hbm [thread:$0]  %s2163, 64, %s13, [#allocation7], 32, 32, 2
    $region57: #{lstm_model_forward.1} parent=1 // pred_fallthru
      _
    // Predicated region
    $region58: #{lstm_model_forward.1} parent=1 // pred_check
      _
    $region59: #{lstm_model_forward.1} parent=1 // pred_check_branch
      %2170 = sbr.rel (0) target = $region61
    $region60: #{lstm_model_forward.1} parent=1 // pred_region
      %2171 = dma.done [#allocation5], 32
    $region61: #{lstm_model_forward.1} parent=1 // pred_fallthru
      _
    // Predicated region
    $region62: #{lstm_model_forward.1} parent=1 // pred_check
      _
    $region63: #{lstm_model_forward.1} parent=1 // pred_check_branch
      %2173 = sbr.rel (0) target = $region65
    $region64: #{lstm_model_forward.1} parent=1 // pred_region
      %2174 = dma.done [#allocation7], 64
    $region65: #{lstm_model_forward.1} parent=1 // pred_fallthru
      _
    // Predicated region
    $region66: #{lstm_model_forward.1} parent=1 // pred_check
      _
    $region67: #{lstm_model_forward.1} parent=1 // pred_check_branch
      %2176 = sbr.rel (0) target = $region69
    $region68: #{lstm_model_forward.1} parent=1 // pred_region
      %2177 = dma.done [#allocation7], 64
    $region69: #{lstm_model_forward.1} parent=1 // pred_fallthru
      _
    %2178 = vsyncpa [#allocation5], 1
    %2179 = vsyncpa [#allocation7], 1

</llo_original>
